<compile_context>
chip_gen: v7x
topology: tpu7x:2x2x1
jax: 0.10.0
libtpu: 0.0.40
codegen_flags: <defaults>
</compile_context>

<pallas_src>
import jax
import jax.numpy as jnp
from jax import lax
from jax.experimental import pallas as pl
from jax.experimental.pallas import tpu as pltpu

BASIS_DIM = 32
HIDDEN_DIM = 64
N_ATTN_LAYERS = 2   # small, consistent with the module (ctor default was 8)
SEQ = 8
EPS = 1e-5

_VMEM_SPEC = pl.BlockSpec(memory_space=pltpu.MemorySpace.VMEM)


def _layer_norm(x):
    # torch F.layer_norm: biased variance, eps=1e-5, no affine params here
    mean = jnp.mean(x, axis=-1, keepdims=True)
    var = jnp.mean((x - mean) ** 2, axis=-1, keepdims=True)
    return (x - mean) * lax.rsqrt(var + EPS)


def _attention_block(x, wqkv, bqkv, w0, b0, w1, b1):
    """One AttentionLayer on VMEM-resident values (no HBM traffic)."""
    H = w1.shape[1]                      # hidden dim
    # fused Q|K|V projection: one (S, in) @ (in, 3H) matmul
    qkv = jnp.dot(x, wqkv, preferred_element_type=jnp.float32) + bqkv
    q = qkv[:, :H]
    k = qkv[:, H:2 * H]
    v = qkv[:, 2 * H:]

    # q @ k.T without materializing the transpose: contract dim 1 with dim 1
    dotp = lax.dot_general(
        q, k, dimension_numbers=(((1,), (1,)), ((), ())),
        preferred_element_type=jnp.float32) * (1.0 / (H ** 0.5))

    # numerically-stable softmax over last dim (tile is only (S, S))
    m = jnp.max(dotp, axis=-1, keepdims=True)
    e = jnp.exp(dotp - m)
    attn = e * pl.reciprocal(jnp.sum(e, axis=-1, keepdims=True), approx=False)

    ws = jnp.dot(attn, v, preferred_element_type=jnp.float32)
    h = _layer_norm(ws + q)

    d0 = jnp.maximum(jnp.dot(h, w0, preferred_element_type=jnp.float32) + b0, 0.0)
    h2 = h + jnp.dot(d0, w1, preferred_element_type=jnp.float32) + b1
    return _layer_norm(h2)


def fused_forward_kernel(*refs):
    """refs = (x, [top 6 w/b], [layer_i 6 w/b] * N, [head 6 w/b], out)."""
    x_ref, o_ref = refs[0], refs[-1]
    wrefs = refs[1:-1]

    x = x_ref[...]
    idx = 0
    # top layer + N attention layers, statically unrolled
    for _ in range(N_ATTN_LAYERS + 1):
        wqkv, bqkv, w0, b0, w1, b1 = (r[...] for r in wrefs[idx:idx + 6])
        x = _attention_block(x, wqkv, bqkv, w0, b0, w1, b1)
        idx += 6

    # head: fc1 -> relu -> fc2 -> relu -> final_dense
    hw1, hb1, hw2, hb2, hwf, hbf = (r[...] for r in wrefs[idx:idx + 6])
    h = jnp.maximum(jnp.dot(x, hw1, preferred_element_type=jnp.float32) + hb1, 0.0)
    h = jnp.maximum(jnp.dot(h, hw2, preferred_element_type=jnp.float32) + hb2, 0.0)
    o_ref[...] = jnp.dot(h, hwf, preferred_element_type=jnp.float32) + hbf


def weights_generator_forward(x, params):
    args = [x]
    for p in [params["top"]] + list(params["layers"]):
        args += [p["wqkv"], p["bqkv"], p["w0"], p["b0"], p["w1"], p["b1"]]
    hp = params["head"]
    args += [hp["w1"], hp["b1"], hp["w2"], hp["b2"], hp["wf"], hp["bf"]]

    out_dim = hp["wf"].shape[1]
    return pl.pallas_call(
        fused_forward_kernel,
        out_shape=jax.ShapeDtypeStruct((x.shape[0], out_dim), jnp.float32),
        in_specs=[_VMEM_SPEC] * len(args),
        out_specs=_VMEM_SPEC,
    )(*args)


# ---------------- deterministic parameter init (PyTorch-style uniform) ----------------
def _linear(key, fan_in, fan_out):
    # weight stored as (in, out); bias as (1, out) for 2-D VMEM friendliness
    kw, kb = jax.random.split(key)
    bound = 1.0 / (fan_in ** 0.5)
    w = jax.random.uniform(kw, (fan_in, fan_out), jnp.float32, -bound, bound)
    b = jax.random.uniform(kb, (1, fan_out), jnp.float32, -bound, bound)
    return w, b


def _attn_params(key, in_dim, hidden):
    ks = jax.random.split(key, 5)
    wq, bq = _linear(ks[0], in_dim, hidden)
    wk, bk = _linear(ks[1], in_dim, hidden)
    wv, bv = _linear(ks[2], in_dim, hidden)
    w0, b0 = _linear(ks[3], hidden, hidden * 2)
    w1, b1 = _linear(ks[4], hidden * 2, hidden)
    # pack Q|K|V so the kernel does a single matmul per layer
    wqkv = jnp.concatenate([wq, wk, wv], axis=1)       # (in, 3*hidden)
    bqkv = jnp.concatenate([bq, bk, bv], axis=1)       # (1, 3*hidden)
    return dict(wqkv=wqkv, bqkv=bqkv, w0=w0, b0=b0, w1=w1, b1=b1)


def make_params(key, basis_dim, hidden, n_layers):
    keys = jax.random.split(key, n_layers + 4)
    params = {"top": _attn_params(keys[0], basis_dim, hidden),
              "layers": [_attn_params(keys[1 + i], hidden, hidden)
                         for i in range(n_layers)]}
    w1, b1 = _linear(keys[n_layers + 1], hidden, hidden)
    w2, b2 = _linear(keys[n_layers + 2], hidden, hidden)
    wf, bf = _linear(keys[n_layers + 3], hidden, basis_dim)
    params["head"] = dict(w1=w1, b1=b1, w2=w2, b2=b2, wf=wf, bf=bf)
    return params


# ---------------- pure-JAX reference (correctness cross-check) ----------------
def _ref_attention_layer(x, p):
    H = p["w1"].shape[1]
    qkv = jnp.dot(x, p["wqkv"], precision=lax.Precision.HIGHEST) + p["bqkv"]
    q, k, v = qkv[:, :H], qkv[:, H:2 * H], qkv[:, 2 * H:]
    dotp = jnp.dot(q, k.T, precision=lax.Precision.HIGHEST) / (H ** 0.5)
    attn = jax.nn.softmax(dotp, axis=-1)
    h = _layer_norm(jnp.dot(attn, v, precision=lax.Precision.HIGHEST) + q)
    d0 = jax.nn.relu(jnp.dot(h, p["w0"], precision=lax.Precision.HIGHEST) + p["b0"])
    return _layer_norm(h + jnp.dot(d0, p["w1"], precision=lax.Precision.HIGHEST) + p["b1"])


def _ref_forward(x, params):
    x = _ref_attention_layer(x, params["top"])
    for p in params["layers"]:
        x = _ref_attention_layer(x, p)
    hp = params["head"]
    h = jax.nn.relu(jnp.dot(x, hp["w1"], precision=lax.Precision.HIGHEST) + hp["b1"])
    h = jax.nn.relu(jnp.dot(h, hp["w2"], precision=lax.Precision.HIGHEST) + hp["b2"])
    return jnp.dot(h, hp["wf"], precision=lax.Precision.HIGHEST) + hp["bf"]


if __name__ == "__main__":
    key = jax.random.PRNGKey(0)
    k_in, k_par = jax.random.split(key)
    x = jax.random.normal(k_in, (SEQ, BASIS_DIM), jnp.float32)
    params = make_params(k_par, BASIS_DIM, HIDDEN_DIM, N_ATTN_LAYERS)

    out = weights_generator_forward(x, params)
    out = jax.block_until_ready(out)

    ref = _ref_forward(x, params)
    assert out.shape == (SEQ, BASIS_DIM)
    assert bool(jnp.all(jnp.isfinite(out)))
    # tolerance accounts for MXU f32 pass-precision differences vs HIGHEST ref
    assert jnp.allclose(out, ref, atol=5e-3, rtol=5e-3), "mismatch vs JAX reference"

    print("KERNEL_OK")
</pallas_src>

<mosaic_0001>
module attributes {stable_mosaic.version = 11 : i64} {
  func.func @fused_forward_kernel(%arg0: memref<8x32xf32, #tpu.memory_space<vmem>>, %arg1: memref<32x192xf32, #tpu.memory_space<vmem>>, %arg2: memref<1x192xf32, #tpu.memory_space<vmem>>, %arg3: memref<64x128xf32, #tpu.memory_space<vmem>>, %arg4: memref<1x128xf32, #tpu.memory_space<vmem>>, %arg5: memref<128x64xf32, #tpu.memory_space<vmem>>, %arg6: memref<1x64xf32, #tpu.memory_space<vmem>>, %arg7: memref<64x192xf32, #tpu.memory_space<vmem>>, %arg8: memref<1x192xf32, #tpu.memory_space<vmem>>, %arg9: memref<64x128xf32, #tpu.memory_space<vmem>>, %arg10: memref<1x128xf32, #tpu.memory_space<vmem>>, %arg11: memref<128x64xf32, #tpu.memory_space<vmem>>, %arg12: memref<1x64xf32, #tpu.memory_space<vmem>>, %arg13: memref<64x192xf32, #tpu.memory_space<vmem>>, %arg14: memref<1x192xf32, #tpu.memory_space<vmem>>, %arg15: memref<64x128xf32, #tpu.memory_space<vmem>>, %arg16: memref<1x128xf32, #tpu.memory_space<vmem>>, %arg17: memref<128x64xf32, #tpu.memory_space<vmem>>, %arg18: memref<1x64xf32, #tpu.memory_space<vmem>>, %arg19: memref<64x64xf32, #tpu.memory_space<vmem>>, %arg20: memref<1x64xf32, #tpu.memory_space<vmem>>, %arg21: memref<64x64xf32, #tpu.memory_space<vmem>>, %arg22: memref<1x64xf32, #tpu.memory_space<vmem>>, %arg23: memref<64x32xf32, #tpu.memory_space<vmem>>, %arg24: memref<1x32xf32, #tpu.memory_space<vmem>>, %arg25: memref<8x32xf32, #tpu.memory_space<vmem>>) attributes {dimension_semantics = [], scalar_prefetch = 0 : i64, scratch_operands = 0 : i64, tpu.core_type = #tpu.core_type<tc>} {
    %c0 = arith.constant 0 : index
    %c0_0 = arith.constant 0 : index
    %0 = vector.load %arg0[%c0, %c0_0] : memref<8x32xf32, #tpu.memory_space<vmem>>, vector<8x32xf32>
    %c0_1 = arith.constant 0 : index
    %c0_2 = arith.constant 0 : index
    %1 = vector.load %arg1[%c0_1, %c0_2] : memref<32x192xf32, #tpu.memory_space<vmem>>, vector<32x192xf32>
    %c0_3 = arith.constant 0 : index
    %c0_4 = arith.constant 0 : index
    %2 = vector.load %arg2[%c0_3, %c0_4] : memref<1x192xf32, #tpu.memory_space<vmem>>, vector<1x192xf32>
    %c0_5 = arith.constant 0 : index
    %c0_6 = arith.constant 0 : index
    %3 = vector.load %arg3[%c0_5, %c0_6] : memref<64x128xf32, #tpu.memory_space<vmem>>, vector<64x128xf32>
    %c0_7 = arith.constant 0 : index
    %c0_8 = arith.constant 0 : index
    %4 = vector.load %arg4[%c0_7, %c0_8] : memref<1x128xf32, #tpu.memory_space<vmem>>, vector<1x128xf32>
    %c0_9 = arith.constant 0 : index
    %c0_10 = arith.constant 0 : index
    %5 = vector.load %arg5[%c0_9, %c0_10] : memref<128x64xf32, #tpu.memory_space<vmem>>, vector<128x64xf32>
    %c0_11 = arith.constant 0 : index
    %c0_12 = arith.constant 0 : index
    %6 = vector.load %arg6[%c0_11, %c0_12] : memref<1x64xf32, #tpu.memory_space<vmem>>, vector<1x64xf32>
    %cst = arith.constant dense<0.000000e+00> : vector<8x192xf32>
    %7 = tpu.matmul %0, %1, %cst {dimension_numbers = #tpu.dot_dimension_numbers<[1], [0], [0], [1], [0, 0, 1, 1], [], []>} : vector<8x32xf32>, vector<32x192xf32>, vector<8x192xf32> -> vector<8x192xf32>
    %8 = vector.broadcast %2 : vector<1x192xf32> to vector<8x192xf32>
    %9 = arith.addf %7, %8 : vector<8x192xf32>
    %10 = vector.extract_strided_slice %9 {offsets = [0, 0], sizes = [8, 64], strides = [1, 1]} : vector<8x192xf32> to vector<8x64xf32>
    %11 = vector.extract_strided_slice %9 {offsets = [0, 64], sizes = [8, 64], strides = [1, 1]} : vector<8x192xf32> to vector<8x64xf32>
    %12 = vector.extract_strided_slice %9 {offsets = [0, 128], sizes = [8, 64], strides = [1, 1]} : vector<8x192xf32> to vector<8x64xf32>
    %cst_13 = arith.constant dense<0.000000e+00> : vector<8x8xf32>
    %13 = tpu.matmul %10, %11, %cst_13 {dimension_numbers = #tpu.dot_dimension_numbers<[1], [1], [0], [0], [0, 0, 1, 0], [], []>} : vector<8x64xf32>, vector<8x64xf32>, vector<8x8xf32> -> vector<8x8xf32>
    %cst_14 = arith.constant 1.250000e-01 : f32
    %14 = vector.broadcast %cst_14 : f32 to vector<8x8xf32>
    %15 = arith.mulf %13, %14 : vector<8x8xf32>
    %cst_15 = arith.constant dense<0xFF800000> : vector<8xf32>
    %16 = vector.multi_reduction <maximumf>, %15, %cst_15 [1] : vector<8x8xf32> to vector<8xf32>
    %17 = vector.shape_cast %16 : vector<8xf32> to vector<8x1xf32>
    %18 = vector.broadcast %17 : vector<8x1xf32> to vector<8x8xf32>
    %19 = arith.subf %15, %18 : vector<8x8xf32>
    %20 = math.exp %19 : vector<8x8xf32>
    %cst_16 = arith.constant dense<0.000000e+00> : vector<8xf32>
    %21 = vector.multi_reduction <add>, %20, %cst_16 [1] : vector<8x8xf32> to vector<8xf32>
    %22 = vector.shape_cast %21 : vector<8xf32> to vector<8x1xf32>
    %23 = tpu.reciprocal %22 : vector<8x1xf32> -> vector<8x1xf32>
    %24 = vector.broadcast %23 : vector<8x1xf32> to vector<8x8xf32>
    %25 = arith.mulf %20, %24 : vector<8x8xf32>
    %cst_17 = arith.constant dense<0.000000e+00> : vector<8x64xf32>
    %26 = tpu.matmul %25, %12, %cst_17 {dimension_numbers = #tpu.dot_dimension_numbers<[1], [0], [0], [1], [0, 0, 1, 1], [], []>} : vector<8x8xf32>, vector<8x64xf32>, vector<8x64xf32> -> vector<8x64xf32>
    %27 = arith.addf %26, %10 : vector<8x64xf32>
    %cst_18 = arith.constant dense<0.000000e+00> : vector<8xf32>
    %28 = vector.multi_reduction <add>, %27, %cst_18 [1] : vector<8x64xf32> to vector<8xf32>
    %29 = vector.shape_cast %28 : vector<8xf32> to vector<8x1xf32>
    %cst_19 = arith.constant 6.400000e+01 : f32
    %30 = vector.broadcast %cst_19 : f32 to vector<8x1xf32>
    %31 = arith.divf %29, %30 : vector<8x1xf32>
    %32 = vector.broadcast %31 : vector<8x1xf32> to vector<8x64xf32>
    %33 = arith.subf %27, %32 : vector<8x64xf32>
    %34 = arith.mulf %33, %33 : vector<8x64xf32>
    %cst_20 = arith.constant dense<0.000000e+00> : vector<8xf32>
    %35 = vector.multi_reduction <add>, %34, %cst_20 [1] : vector<8x64xf32> to vector<8xf32>
    %36 = vector.shape_cast %35 : vector<8xf32> to vector<8x1xf32>
    %cst_21 = arith.constant 6.400000e+01 : f32
    %37 = vector.broadcast %cst_21 : f32 to vector<8x1xf32>
    %38 = arith.divf %36, %37 : vector<8x1xf32>
    %39 = vector.broadcast %31 : vector<8x1xf32> to vector<8x64xf32>
    %40 = arith.subf %27, %39 : vector<8x64xf32>
    %cst_22 = arith.constant 9.99999974E-6 : f32
    %41 = vector.broadcast %cst_22 : f32 to vector<8x1xf32>
    %42 = arith.addf %38, %41 : vector<8x1xf32>
    %43 = math.rsqrt %42 : vector<8x1xf32>
    %44 = vector.broadcast %43 : vector<8x1xf32> to vector<8x64xf32>
    %45 = arith.mulf %40, %44 : vector<8x64xf32>
    %cst_23 = arith.constant dense<0.000000e+00> : vector<8x128xf32>
    %46 = tpu.matmul %45, %3, %cst_23 {dimension_numbers = #tpu.dot_dimension_numbers<[1], [0], [0], [1], [0, 0, 1, 1], [], []>} : vector<8x64xf32>, vector<64x128xf32>, vector<8x128xf32> -> vector<8x128xf32>
    %47 = vector.broadcast %4 : vector<1x128xf32> to vector<8x128xf32>
    %48 = arith.addf %46, %47 : vector<8x128xf32>
    %cst_24 = arith.constant 0.000000e+00 : f32
    %49 = vector.broadcast %cst_24 : f32 to vector<8x128xf32>
    %50 = arith.maximumf %48, %49 : vector<8x128xf32>
    %cst_25 = arith.constant dense<0.000000e+00> : vector<8x64xf32>
    %51 = tpu.matmul %50, %5, %cst_25 {dimension_numbers = #tpu.dot_dimension_numbers<[1], [0], [0], [1], [0, 0, 1, 1], [], []>} : vector<8x128xf32>, vector<128x64xf32>, vector<8x64xf32> -> vector<8x64xf32>
    %52 = arith.addf %45, %51 : vector<8x64xf32>
    %53 = vector.broadcast %6 : vector<1x64xf32> to vector<8x64xf32>
    %54 = arith.addf %52, %53 : vector<8x64xf32>
    %cst_26 = arith.constant dense<0.000000e+00> : vector<8xf32>
    %55 = vector.multi_reduction <add>, %54, %cst_26 [1] : vector<8x64xf32> to vector<8xf32>
    %56 = vector.shape_cast %55 : vector<8xf32> to vector<8x1xf32>
    %cst_27 = arith.constant 6.400000e+01 : f32
    %57 = vector.broadcast %cst_27 : f32 to vector<8x1xf32>
    %58 = arith.divf %56, %57 : vector<8x1xf32>
    %59 = vector.broadcast %58 : vector<8x1xf32> to vector<8x64xf32>
    %60 = arith.subf %54, %59 : vector<8x64xf32>
    %61 = arith.mulf %60, %60 : vector<8x64xf32>
    %cst_28 = arith.constant dense<0.000000e+00> : vector<8xf32>
    %62 = vector.multi_reduction <add>, %61, %cst_28 [1] : vector<8x64xf32> to vector<8xf32>
    %63 = vector.shape_cast %62 : vector<8xf32> to vector<8x1xf32>
    %cst_29 = arith.constant 6.400000e+01 : f32
    %64 = vector.broadcast %cst_29 : f32 to vector<8x1xf32>
    %65 = arith.divf %63, %64 : vector<8x1xf32>
    %66 = vector.broadcast %58 : vector<8x1xf32> to vector<8x64xf32>
    %67 = arith.subf %54, %66 : vector<8x64xf32>
    %cst_30 = arith.constant 9.99999974E-6 : f32
    %68 = vector.broadcast %cst_30 : f32 to vector<8x1xf32>
    %69 = arith.addf %65, %68 : vector<8x1xf32>
    %70 = math.rsqrt %69 : vector<8x1xf32>
    %71 = vector.broadcast %70 : vector<8x1xf32> to vector<8x64xf32>
    %72 = arith.mulf %67, %71 : vector<8x64xf32>
    %c0_31 = arith.constant 0 : index
    %c0_32 = arith.constant 0 : index
    %73 = vector.load %arg7[%c0_31, %c0_32] : memref<64x192xf32, #tpu.memory_space<vmem>>, vector<64x192xf32>
    %c0_33 = arith.constant 0 : index
    %c0_34 = arith.constant 0 : index
    %74 = vector.load %arg8[%c0_33, %c0_34] : memref<1x192xf32, #tpu.memory_space<vmem>>, vector<1x192xf32>
    %c0_35 = arith.constant 0 : index
    %c0_36 = arith.constant 0 : index
    %75 = vector.load %arg9[%c0_35, %c0_36] : memref<64x128xf32, #tpu.memory_space<vmem>>, vector<64x128xf32>
    %c0_37 = arith.constant 0 : index
    %c0_38 = arith.constant 0 : index
    %76 = vector.load %arg10[%c0_37, %c0_38] : memref<1x128xf32, #tpu.memory_space<vmem>>, vector<1x128xf32>
    %c0_39 = arith.constant 0 : index
    %c0_40 = arith.constant 0 : index
    %77 = vector.load %arg11[%c0_39, %c0_40] : memref<128x64xf32, #tpu.memory_space<vmem>>, vector<128x64xf32>
    %c0_41 = arith.constant 0 : index
    %c0_42 = arith.constant 0 : index
    %78 = vector.load %arg12[%c0_41, %c0_42] : memref<1x64xf32, #tpu.memory_space<vmem>>, vector<1x64xf32>
    %cst_43 = arith.constant dense<0.000000e+00> : vector<8x192xf32>
    %79 = tpu.matmul %72, %73, %cst_43 {dimension_numbers = #tpu.dot_dimension_numbers<[1], [0], [0], [1], [0, 0, 1, 1], [], []>} : vector<8x64xf32>, vector<64x192xf32>, vector<8x192xf32> -> vector<8x192xf32>
    %80 = vector.broadcast %74 : vector<1x192xf32> to vector<8x192xf32>
    %81 = arith.addf %79, %80 : vector<8x192xf32>
    %82 = vector.extract_strided_slice %81 {offsets = [0, 0], sizes = [8, 64], strides = [1, 1]} : vector<8x192xf32> to vector<8x64xf32>
    %83 = vector.extract_strided_slice %81 {offsets = [0, 64], sizes = [8, 64], strides = [1, 1]} : vector<8x192xf32> to vector<8x64xf32>
    %84 = vector.extract_strided_slice %81 {offsets = [0, 128], sizes = [8, 64], strides = [1, 1]} : vector<8x192xf32> to vector<8x64xf32>
    %cst_44 = arith.constant dense<0.000000e+00> : vector<8x8xf32>
    %85 = tpu.matmul %82, %83, %cst_44 {dimension_numbers = #tpu.dot_dimension_numbers<[1], [1], [0], [0], [0, 0, 1, 0], [], []>} : vector<8x64xf32>, vector<8x64xf32>, vector<8x8xf32> -> vector<8x8xf32>
    %cst_45 = arith.constant 1.250000e-01 : f32
    %86 = vector.broadcast %cst_45 : f32 to vector<8x8xf32>
    %87 = arith.mulf %85, %86 : vector<8x8xf32>
    %cst_46 = arith.constant dense<0xFF800000> : vector<8xf32>
    %88 = vector.multi_reduction <maximumf>, %87, %cst_46 [1] : vector<8x8xf32> to vector<8xf32>
    %89 = vector.shape_cast %88 : vector<8xf32> to vector<8x1xf32>
    %90 = vector.broadcast %89 : vector<8x1xf32> to vector<8x8xf32>
    %91 = arith.subf %87, %90 : vector<8x8xf32>
    %92 = math.exp %91 : vector<8x8xf32>
    %cst_47 = arith.constant dense<0.000000e+00> : vector<8xf32>
    %93 = vector.multi_reduction <add>, %92, %cst_47 [1] : vector<8x8xf32> to vector<8xf32>
    %94 = vector.shape_cast %93 : vector<8xf32> to vector<8x1xf32>
    %95 = tpu.reciprocal %94 : vector<8x1xf32> -> vector<8x1xf32>
    %96 = vector.broadcast %95 : vector<8x1xf32> to vector<8x8xf32>
    %97 = arith.mulf %92, %96 : vector<8x8xf32>
    %cst_48 = arith.constant dense<0.000000e+00> : vector<8x64xf32>
    %98 = tpu.matmul %97, %84, %cst_48 {dimension_numbers = #tpu.dot_dimension_numbers<[1], [0], [0], [1], [0, 0, 1, 1], [], []>} : vector<8x8xf32>, vector<8x64xf32>, vector<8x64xf32> -> vector<8x64xf32>
    %99 = arith.addf %98, %82 : vector<8x64xf32>
    %cst_49 = arith.constant dense<0.000000e+00> : vector<8xf32>
    %100 = vector.multi_reduction <add>, %99, %cst_49 [1] : vector<8x64xf32> to vector<8xf32>
    %101 = vector.shape_cast %100 : vector<8xf32> to vector<8x1xf32>
    %cst_50 = arith.constant 6.400000e+01 : f32
    %102 = vector.broadcast %cst_50 : f32 to vector<8x1xf32>
    %103 = arith.divf %101, %102 : vector<8x1xf32>
    %104 = vector.broadcast %103 : vector<8x1xf32> to vector<8x64xf32>
    %105 = arith.subf %99, %104 : vector<8x64xf32>
    %106 = arith.mulf %105, %105 : vector<8x64xf32>
    %cst_51 = arith.constant dense<0.000000e+00> : vector<8xf32>
    %107 = vector.multi_reduction <add>, %106, %cst_51 [1] : vector<8x64xf32> to vector<8xf32>
    %108 = vector.shape_cast %107 : vector<8xf32> to vector<8x1xf32>
    %cst_52 = arith.constant 6.400000e+01 : f32
    %109 = vector.broadcast %cst_52 : f32 to vector<8x1xf32>
    %110 = arith.divf %108, %109 : vector<8x1xf32>
    %111 = vector.broadcast %103 : vector<8x1xf32> to vector<8x64xf32>
    %112 = arith.subf %99, %111 : vector<8x64xf32>
    %cst_53 = arith.constant 9.99999974E-6 : f32
    %113 = vector.broadcast %cst_53 : f32 to vector<8x1xf32>
    %114 = arith.addf %110, %113 : vector<8x1xf32>
    %115 = math.rsqrt %114 : vector<8x1xf32>
    %116 = vector.broadcast %115 : vector<8x1xf32> to vector<8x64xf32>
    %117 = arith.mulf %112, %116 : vector<8x64xf32>
    %cst_54 = arith.constant dense<0.000000e+00> : vector<8x128xf32>
    %118 = tpu.matmul %117, %75, %cst_54 {dimension_numbers = #tpu.dot_dimension_numbers<[1], [0], [0], [1], [0, 0, 1, 1], [], []>} : vector<8x64xf32>, vector<64x128xf32>, vector<8x128xf32> -> vector<8x128xf32>
    %119 = vector.broadcast %76 : vector<1x128xf32> to vector<8x128xf32>
    %120 = arith.addf %118, %119 : vector<8x128xf32>
    %cst_55 = arith.constant 0.000000e+00 : f32
    %121 = vector.broadcast %cst_55 : f32 to vector<8x128xf32>
    %122 = arith.maximumf %120, %121 : vector<8x128xf32>
    %cst_56 = arith.constant dense<0.000000e+00> : vector<8x64xf32>
    %123 = tpu.matmul %122, %77, %cst_56 {dimension_numbers = #tpu.dot_dimension_numbers<[1], [0], [0], [1], [0, 0, 1, 1], [], []>} : vector<8x128xf32>, vector<128x64xf32>, vector<8x64xf32> -> vector<8x64xf32>
    %124 = arith.addf %117, %123 : vector<8x64xf32>
    %125 = vector.broadcast %78 : vector<1x64xf32> to vector<8x64xf32>
    %126 = arith.addf %124, %125 : vector<8x64xf32>
    %cst_57 = arith.constant dense<0.000000e+00> : vector<8xf32>
    %127 = vector.multi_reduction <add>, %126, %cst_57 [1] : vector<8x64xf32> to vector<8xf32>
    %128 = vector.shape_cast %127 : vector<8xf32> to vector<8x1xf32>
    %cst_58 = arith.constant 6.400000e+01 : f32
    %129 = vector.broadcast %cst_58 : f32 to vector<8x1xf32>
    %130 = arith.divf %128, %129 : vector<8x1xf32>
    %131 = vector.broadcast %130 : vector<8x1xf32> to vector<8x64xf32>
    %132 = arith.subf %126, %131 : vector<8x64xf32>
    %133 = arith.mulf %132, %132 : vector<8x64xf32>
    %cst_59 = arith.constant dense<0.000000e+00> : vector<8xf32>
    %134 = vector.multi_reduction <add>, %133, %cst_59 [1] : vector<8x64xf32> to vector<8xf32>
    %135 = vector.shape_cast %134 : vector<8xf32> to vector<8x1xf32>
    %cst_60 = arith.constant 6.400000e+01 : f32
    %136 = vector.broadcast %cst_60 : f32 to vector<8x1xf32>
    %137 = arith.divf %135, %136 : vector<8x1xf32>
    %138 = vector.broadcast %130 : vector<8x1xf32> to vector<8x64xf32>
    %139 = arith.subf %126, %138 : vector<8x64xf32>
    %cst_61 = arith.constant 9.99999974E-6 : f32
    %140 = vector.broadcast %cst_61 : f32 to vector<8x1xf32>
    %141 = arith.addf %137, %140 : vector<8x1xf32>
    %142 = math.rsqrt %141 : vector<8x1xf32>
    %143 = vector.broadcast %142 : vector<8x1xf32> to vector<8x64xf32>
    %144 = arith.mulf %139, %143 : vector<8x64xf32>
    %c0_62 = arith.constant 0 : index
    %c0_63 = arith.constant 0 : index
    %145 = vector.load %arg13[%c0_62, %c0_63] : memref<64x192xf32, #tpu.memory_space<vmem>>, vector<64x192xf32>
    %c0_64 = arith.constant 0 : index
    %c0_65 = arith.constant 0 : index
    %146 = vector.load %arg14[%c0_64, %c0_65] : memref<1x192xf32, #tpu.memory_space<vmem>>, vector<1x192xf32>
    %c0_66 = arith.constant 0 : index
    %c0_67 = arith.constant 0 : index
    %147 = vector.load %arg15[%c0_66, %c0_67] : memref<64x128xf32, #tpu.memory_space<vmem>>, vector<64x128xf32>
    %c0_68 = arith.constant 0 : index
    %c0_69 = arith.constant 0 : index
    %148 = vector.load %arg16[%c0_68, %c0_69] : memref<1x128xf32, #tpu.memory_space<vmem>>, vector<1x128xf32>
    %c0_70 = arith.constant 0 : index
    %c0_71 = arith.constant 0 : index
    %149 = vector.load %arg17[%c0_70, %c0_71] : memref<128x64xf32, #tpu.memory_space<vmem>>, vector<128x64xf32>
    %c0_72 = arith.constant 0 : index
    %c0_73 = arith.constant 0 : index
    %150 = vector.load %arg18[%c0_72, %c0_73] : memref<1x64xf32, #tpu.memory_space<vmem>>, vector<1x64xf32>
    %cst_74 = arith.constant dense<0.000000e+00> : vector<8x192xf32>
    %151 = tpu.matmul %144, %145, %cst_74 {dimension_numbers = #tpu.dot_dimension_numbers<[1], [0], [0], [1], [0, 0, 1, 1], [], []>} : vector<8x64xf32>, vector<64x192xf32>, vector<8x192xf32> -> vector<8x192xf32>
    %152 = vector.broadcast %146 : vector<1x192xf32> to vector<8x192xf32>
    %153 = arith.addf %151, %152 : vector<8x192xf32>
    %154 = vector.extract_strided_slice %153 {offsets = [0, 0], sizes = [8, 64], strides = [1, 1]} : vector<8x192xf32> to vector<8x64xf32>
    %155 = vector.extract_strided_slice %153 {offsets = [0, 64], sizes = [8, 64], strides = [1, 1]} : vector<8x192xf32> to vector<8x64xf32>
    %156 = vector.extract_strided_slice %153 {offsets = [0, 128], sizes = [8, 64], strides = [1, 1]} : vector<8x192xf32> to vector<8x64xf32>
    %cst_75 = arith.constant dense<0.000000e+00> : vector<8x8xf32>
    %157 = tpu.matmul %154, %155, %cst_75 {dimension_numbers = #tpu.dot_dimension_numbers<[1], [1], [0], [0], [0, 0, 1, 0], [], []>} : vector<8x64xf32>, vector<8x64xf32>, vector<8x8xf32> -> vector<8x8xf32>
    %cst_76 = arith.constant 1.250000e-01 : f32
    %158 = vector.broadcast %cst_76 : f32 to vector<8x8xf32>
    %159 = arith.mulf %157, %158 : vector<8x8xf32>
    %cst_77 = arith.constant dense<0xFF800000> : vector<8xf32>
    %160 = vector.multi_reduction <maximumf>, %159, %cst_77 [1] : vector<8x8xf32> to vector<8xf32>
    %161 = vector.shape_cast %160 : vector<8xf32> to vector<8x1xf32>
    %162 = vector.broadcast %161 : vector<8x1xf32> to vector<8x8xf32>
    %163 = arith.subf %159, %162 : vector<8x8xf32>
    %164 = math.exp %163 : vector<8x8xf32>
    %cst_78 = arith.constant dense<0.000000e+00> : vector<8xf32>
    %165 = vector.multi_reduction <add>, %164, %cst_78 [1] : vector<8x8xf32> to vector<8xf32>
    %166 = vector.shape_cast %165 : vector<8xf32> to vector<8x1xf32>
    %167 = tpu.reciprocal %166 : vector<8x1xf32> -> vector<8x1xf32>
    %168 = vector.broadcast %167 : vector<8x1xf32> to vector<8x8xf32>
    %169 = arith.mulf %164, %168 : vector<8x8xf32>
    %cst_79 = arith.constant dense<0.000000e+00> : vector<8x64xf32>
    %170 = tpu.matmul %169, %156, %cst_79 {dimension_numbers = #tpu.dot_dimension_numbers<[1], [0], [0], [1], [0, 0, 1, 1], [], []>} : vector<8x8xf32>, vector<8x64xf32>, vector<8x64xf32> -> vector<8x64xf32>
    %171 = arith.addf %170, %154 : vector<8x64xf32>
    %cst_80 = arith.constant dense<0.000000e+00> : vector<8xf32>
    %172 = vector.multi_reduction <add>, %171, %cst_80 [1] : vector<8x64xf32> to vector<8xf32>
    %173 = vector.shape_cast %172 : vector<8xf32> to vector<8x1xf32>
    %cst_81 = arith.constant 6.400000e+01 : f32
    %174 = vector.broadcast %cst_81 : f32 to vector<8x1xf32>
    %175 = arith.divf %173, %174 : vector<8x1xf32>
    %176 = vector.broadcast %175 : vector<8x1xf32> to vector<8x64xf32>
    %177 = arith.subf %171, %176 : vector<8x64xf32>
    %178 = arith.mulf %177, %177 : vector<8x64xf32>
    %cst_82 = arith.constant dense<0.000000e+00> : vector<8xf32>
    %179 = vector.multi_reduction <add>, %178, %cst_82 [1] : vector<8x64xf32> to vector<8xf32>
    %180 = vector.shape_cast %179 : vector<8xf32> to vector<8x1xf32>
    %cst_83 = arith.constant 6.400000e+01 : f32
    %181 = vector.broadcast %cst_83 : f32 to vector<8x1xf32>
    %182 = arith.divf %180, %181 : vector<8x1xf32>
    %183 = vector.broadcast %175 : vector<8x1xf32> to vector<8x64xf32>
    %184 = arith.subf %171, %183 : vector<8x64xf32>
    %cst_84 = arith.constant 9.99999974E-6 : f32
    %185 = vector.broadcast %cst_84 : f32 to vector<8x1xf32>
    %186 = arith.addf %182, %185 : vector<8x1xf32>
    %187 = math.rsqrt %186 : vector<8x1xf32>
    %188 = vector.broadcast %187 : vector<8x1xf32> to vector<8x64xf32>
    %189 = arith.mulf %184, %188 : vector<8x64xf32>
    %cst_85 = arith.constant dense<0.000000e+00> : vector<8x128xf32>
    %190 = tpu.matmul %189, %147, %cst_85 {dimension_numbers = #tpu.dot_dimension_numbers<[1], [0], [0], [1], [0, 0, 1, 1], [], []>} : vector<8x64xf32>, vector<64x128xf32>, vector<8x128xf32> -> vector<8x128xf32>
    %191 = vector.broadcast %148 : vector<1x128xf32> to vector<8x128xf32>
    %192 = arith.addf %190, %191 : vector<8x128xf32>
    %cst_86 = arith.constant 0.000000e+00 : f32
    %193 = vector.broadcast %cst_86 : f32 to vector<8x128xf32>
    %194 = arith.maximumf %192, %193 : vector<8x128xf32>
    %cst_87 = arith.constant dense<0.000000e+00> : vector<8x64xf32>
    %195 = tpu.matmul %194, %149, %cst_87 {dimension_numbers = #tpu.dot_dimension_numbers<[1], [0], [0], [1], [0, 0, 1, 1], [], []>} : vector<8x128xf32>, vector<128x64xf32>, vector<8x64xf32> -> vector<8x64xf32>
    %196 = arith.addf %189, %195 : vector<8x64xf32>
    %197 = vector.broadcast %150 : vector<1x64xf32> to vector<8x64xf32>
    %198 = arith.addf %196, %197 : vector<8x64xf32>
    %cst_88 = arith.constant dense<0.000000e+00> : vector<8xf32>
    %199 = vector.multi_reduction <add>, %198, %cst_88 [1] : vector<8x64xf32> to vector<8xf32>
    %200 = vector.shape_cast %199 : vector<8xf32> to vector<8x1xf32>
    %cst_89 = arith.constant 6.400000e+01 : f32
    %201 = vector.broadcast %cst_89 : f32 to vector<8x1xf32>
    %202 = arith.divf %200, %201 : vector<8x1xf32>
    %203 = vector.broadcast %202 : vector<8x1xf32> to vector<8x64xf32>
    %204 = arith.subf %198, %203 : vector<8x64xf32>
    %205 = arith.mulf %204, %204 : vector<8x64xf32>
    %cst_90 = arith.constant dense<0.000000e+00> : vector<8xf32>
    %206 = vector.multi_reduction <add>, %205, %cst_90 [1] : vector<8x64xf32> to vector<8xf32>
    %207 = vector.shape_cast %206 : vector<8xf32> to vector<8x1xf32>
    %cst_91 = arith.constant 6.400000e+01 : f32
    %208 = vector.broadcast %cst_91 : f32 to vector<8x1xf32>
    %209 = arith.divf %207, %208 : vector<8x1xf32>
    %210 = vector.broadcast %202 : vector<8x1xf32> to vector<8x64xf32>
    %211 = arith.subf %198, %210 : vector<8x64xf32>
    %cst_92 = arith.constant 9.99999974E-6 : f32
    %212 = vector.broadcast %cst_92 : f32 to vector<8x1xf32>
    %213 = arith.addf %209, %212 : vector<8x1xf32>
    %214 = math.rsqrt %213 : vector<8x1xf32>
    %215 = vector.broadcast %214 : vector<8x1xf32> to vector<8x64xf32>
    %216 = arith.mulf %211, %215 : vector<8x64xf32>
    %c0_93 = arith.constant 0 : index
    %c0_94 = arith.constant 0 : index
    %217 = vector.load %arg19[%c0_93, %c0_94] : memref<64x64xf32, #tpu.memory_space<vmem>>, vector<64x64xf32>
    %c0_95 = arith.constant 0 : index
    %c0_96 = arith.constant 0 : index
    %218 = vector.load %arg20[%c0_95, %c0_96] : memref<1x64xf32, #tpu.memory_space<vmem>>, vector<1x64xf32>
    %c0_97 = arith.constant 0 : index
    %c0_98 = arith.constant 0 : index
    %219 = vector.load %arg21[%c0_97, %c0_98] : memref<64x64xf32, #tpu.memory_space<vmem>>, vector<64x64xf32>
    %c0_99 = arith.constant 0 : index
    %c0_100 = arith.constant 0 : index
    %220 = vector.load %arg22[%c0_99, %c0_100] : memref<1x64xf32, #tpu.memory_space<vmem>>, vector<1x64xf32>
    %c0_101 = arith.constant 0 : index
    %c0_102 = arith.constant 0 : index
    %221 = vector.load %arg23[%c0_101, %c0_102] : memref<64x32xf32, #tpu.memory_space<vmem>>, vector<64x32xf32>
    %c0_103 = arith.constant 0 : index
    %c0_104 = arith.constant 0 : index
    %222 = vector.load %arg24[%c0_103, %c0_104] : memref<1x32xf32, #tpu.memory_space<vmem>>, vector<1x32xf32>
    %cst_105 = arith.constant dense<0.000000e+00> : vector<8x64xf32>
    %223 = tpu.matmul %216, %217, %cst_105 {dimension_numbers = #tpu.dot_dimension_numbers<[1], [0], [0], [1], [0, 0, 1, 1], [], []>} : vector<8x64xf32>, vector<64x64xf32>, vector<8x64xf32> -> vector<8x64xf32>
    %224 = vector.broadcast %218 : vector<1x64xf32> to vector<8x64xf32>
    %225 = arith.addf %223, %224 : vector<8x64xf32>
    %cst_106 = arith.constant 0.000000e+00 : f32
    %226 = vector.broadcast %cst_106 : f32 to vector<8x64xf32>
    %227 = arith.maximumf %225, %226 : vector<8x64xf32>
    %cst_107 = arith.constant dense<0.000000e+00> : vector<8x64xf32>
    %228 = tpu.matmul %227, %219, %cst_107 {dimension_numbers = #tpu.dot_dimension_numbers<[1], [0], [0], [1], [0, 0, 1, 1], [], []>} : vector<8x64xf32>, vector<64x64xf32>, vector<8x64xf32> -> vector<8x64xf32>
    %229 = vector.broadcast %220 : vector<1x64xf32> to vector<8x64xf32>
    %230 = arith.addf %228, %229 : vector<8x64xf32>
    %cst_108 = arith.constant 0.000000e+00 : f32
    %231 = vector.broadcast %cst_108 : f32 to vector<8x64xf32>
    %232 = arith.maximumf %230, %231 : vector<8x64xf32>
    %cst_109 = arith.constant dense<0.000000e+00> : vector<8x32xf32>
    %233 = tpu.matmul %232, %221, %cst_109 {dimension_numbers = #tpu.dot_dimension_numbers<[1], [0], [0], [1], [0, 0, 1, 1], [], []>} : vector<8x64xf32>, vector<64x32xf32>, vector<8x32xf32> -> vector<8x32xf32>
    %234 = vector.broadcast %222 : vector<1x32xf32> to vector<8x32xf32>
    %235 = arith.addf %233, %234 : vector<8x32xf32>
    %c0_110 = arith.constant 0 : index
    %c0_111 = arith.constant 0 : index
    %236 = vector.load %arg25[%c0_110, %c0_111] : memref<8x32xf32, #tpu.memory_space<vmem>>, vector<8x32xf32>
    tpu.vector_store %arg25[%c0_110, %c0_111], %235 {strides = array<i32>} : memref<8x32xf32, #tpu.memory_space<vmem>>, vector<8x32xf32>,
    return
  }
}

</mosaic_0001>

<llo_original>
// kernel: tpu_custom_call.1
$region0: #{tpu_custom_call.1}
  #allocation0 [shape = 'u32[]', space=smem, size = 0x4, offset = 0x4, fixed_abs, tag = 'smem constant byte address 0x4 - core index']
  #allocation1 [shape = 'u32[144,128]{1,0:T(1,128)}', space=vmem, size = 0x12000, scoped, tag = 'internal scratch']
  %s0 = inlined_call_operand.hbm [shape: f32[8,32], index: 0, kind: input, shape index: {}]
  %s1 = inlined_call_operand.vmem [shape: f32[32,192], index: 1, kind: input, shape index: {}]
  %s2 = inlined_call_operand.hbm [shape: f32[1,192], index: 2, kind: input, shape index: {}]
  %s3 = inlined_call_operand.vmem [shape: f32[64,128], index: 3, kind: input, shape index: {}]
  %s4 = inlined_call_operand.hbm [shape: f32[1,128], index: 4, kind: input, shape index: {}]
  %s5 = inlined_call_operand.vmem [shape: f32[128,64], index: 5, kind: input, shape index: {}]
  %s6 = inlined_call_operand.hbm [shape: f32[1,64], index: 6, kind: input, shape index: {}]
  %s7 = inlined_call_operand.vmem [shape: f32[64,192], index: 7, kind: input, shape index: {}]
  %s8 = inlined_call_operand.hbm [shape: f32[1,192], index: 8, kind: input, shape index: {}]
  %s9 = inlined_call_operand.vmem [shape: f32[64,128], index: 9, kind: input, shape index: {}]
  %s10 = inlined_call_operand.hbm [shape: f32[1,128], index: 10, kind: input, shape index: {}]
  %s11 = inlined_call_operand.vmem [shape: f32[128,64], index: 11, kind: input, shape index: {}]
  %s12 = inlined_call_operand.hbm [shape: f32[1,64], index: 12, kind: input, shape index: {}]
  %s13 = inlined_call_operand.vmem [shape: f32[64,192], index: 13, kind: input, shape index: {}]
  %s14 = inlined_call_operand.hbm [shape: f32[1,192], index: 14, kind: input, shape index: {}]
  %s15 = inlined_call_operand.vmem [shape: f32[64,128], index: 15, kind: input, shape index: {}]
  %s16 = inlined_call_operand.hbm [shape: f32[1,128], index: 16, kind: input, shape index: {}]
  %s17 = inlined_call_operand.vmem [shape: f32[128,64], index: 17, kind: input, shape index: {}]
  %s18 = inlined_call_operand.vmem [shape: f32[1,64], index: 18, kind: input, shape index: {}]
  %s19 = inlined_call_operand.hbm [shape: f32[64,64], index: 19, kind: input, shape index: {}]
  %s20 = inlined_call_operand.vmem [shape: f32[1,64], index: 20, kind: input, shape index: {}]
  %s21 = inlined_call_operand.hbm [shape: f32[64,64], index: 21, kind: input, shape index: {}]
  %s22 = inlined_call_operand.vmem [shape: f32[1,64], index: 22, kind: input, shape index: {}]
  %s23 = inlined_call_operand.vmem [shape: f32[64,32], index: 23, kind: input, shape index: {}]
  %s24 = inlined_call_operand.vmem [shape: f32[1,32], index: 24, kind: input, shape index: {}]
  %s25 = inlined_call_operand.hbm [shape: f32[8,32], index: 25, kind: output, shape index: {}]
  %s26 = sld [smem:[#allocation0]]
  $region154: #{tpu_custom_call.1} parent=0
    _
  %s28 = ssub.s32 1, %s26
  %s29 = scalar_select 0, %s28, %s26
  $region1: #{tpu_custom_call.1} parent=0
    #allocation2 [shape = 'u8[4096]{0}', space=vmem, size = 0x1000, scoped, tag = 'input window, operand 0, single buffered']
    #allocation3 [shape = 's32[1]{0}', space=sflag, size = 0x4, scoped, tag = 'scoped memory for tpu_custom_call.1']
    #allocation4 [shape = 's32[1]{0}', space=sflag, size = 0x4, scoped, tag = 'scoped memory for tpu_custom_call.1']
    #allocation5 [shape = 'u8[1024]{0}', space=vmem, size = 0x400, scoped, tag = 'input window, operand 2, single buffered']
    #allocation6 [shape = 's32[1]{0}', space=sflag, size = 0x4, scoped, tag = 'scoped memory for tpu_custom_call.1']
    #allocation7 [shape = 'u8[512]{0}', space=vmem, size = 0x400, scoped, tag = 'input window, operand 4, single buffered']
    #allocation8 [shape = 'u8[512]{0}', space=vmem, size = 0x400, scoped, tag = 'input window, operand 6, single buffered']
    #allocation9 [shape = 's32[1]{0}', space=sflag, size = 0x4, scoped, tag = 'scoped memory for tpu_custom_call.1']
    #allocation10 [shape = 'u8[1024]{0}', space=vmem, size = 0x400, scoped, tag = 'input window, operand 8, single buffered']
    #allocation11 [shape = 'u8[512]{0}', space=vmem, size = 0x400, scoped, tag = 'input window, operand 10, single buffered']
    #allocation12 [shape = 's32[1]{0}', space=sflag, size = 0x4, scoped, tag = 'scoped memory for tpu_custom_call.1']
    #allocation13 [shape = 'u8[512]{0}', space=vmem, size = 0x400, scoped, tag = 'input window, operand 12, single buffered']
    #allocation14 [shape = 'u8[1024]{0}', space=vmem, size = 0x400, scoped, tag = 'input window, operand 14, single buffered']
    #allocation15 [shape = 's32[1]{0}', space=sflag, size = 0x4, scoped, tag = 'scoped memory for tpu_custom_call.1']
    #allocation16 [shape = 'u8[512]{0}', space=vmem, size = 0x400, scoped, tag = 'input window, operand 16, single buffered']
    #allocation17 [shape = 'u8[32768]{0}', space=vmem, size = 0x8000, scoped, tag = 'input window, operand 19, single buffered']
    #allocation18 [shape = 's32[1]{0}', space=sflag, size = 0x4, scoped, tag = 'scoped memory for tpu_custom_call.1']
    #allocation19 [shape = 'u8[32768]{0}', space=vmem, size = 0x8000, scoped, tag = 'input window, operand 21, single buffered']
    #allocation20 [shape = 'u8[4096]{0}', space=vmem, size = 0x1000, scoped, tag = 'output window, operand 0, single buffered']
    %30 = vsyncpa [#allocation3], 0
    %31 = vsyncpa [#allocation6], 0
    %32 = vsyncpa [#allocation9], 0
    %33 = vsyncpa [#allocation12], 0
    %34 = vsyncpa [#allocation15], 0
    %35 = vsyncpa [#allocation18], 0
    %36 = vsyncpa [#allocation4], 0
    // Predicated region
    $region2: #{tpu_custom_call.1} parent=1 // pred_check
      _
    $region3: #{tpu_custom_call.1} parent=1 // pred_check_branch
      %38 = sbr.rel (0) target = $region5
    $region4: #{tpu_custom_call.1} parent=1 // pred_region
      %s40 = ssub.s32 128, 128
      %41 = vsyncadd [#allocation3], %s40
      %s43 = sshll.u32 [#allocation2], 4
      %s44 = int_to_ptr.vmem [resolvable:$true] %s43
      %46 = dma.hbm_to_vmem [thread:$0]  %s0, 128, %s44, [#allocation3]
    $region5: #{tpu_custom_call.1} parent=1 // pred_fallthru
      _
    // Predicated region
    $region6: #{tpu_custom_call.1} parent=1 // pred_check
      _
    $region7: #{tpu_custom_call.1} parent=1 // pred_check_branch
      %48 = sbr.rel (0) target = $region9
    $region8: #{tpu_custom_call.1} parent=1 // pred_region
      _
    $region9: #{tpu_custom_call.1} parent=1 // pred_fallthru
      _
    // Predicated region
    $region10: #{tpu_custom_call.1} parent=1 // pred_check
      _
    $region11: #{tpu_custom_call.1} parent=1 // pred_check_branch
      %50 = sbr.rel (0) target = $region13
    $region12: #{tpu_custom_call.1} parent=1 // pred_region
      %s52 = ssub.s32 32, 32
      %53 = vsyncadd [#allocation6], %s52
      %s55 = sshll.u32 [#allocation5], 4
      %s56 = int_to_ptr.vmem [resolvable:$true] %s55
      %58 = dma.hbm_to_vmem [thread:$0]  %s2, 32, %s56, [#allocation6]
    $region13: #{tpu_custom_call.1} parent=1 // pred_fallthru
      _
    // Predicated region
    $region14: #{tpu_custom_call.1} parent=1 // pred_check
      _
    $region15: #{tpu_custom_call.1} parent=1 // pred_check_branch
      %60 = sbr.rel (0) target = $region17
    $region16: #{tpu_custom_call.1} parent=1 // pred_region
      _
    $region17: #{tpu_custom_call.1} parent=1 // pred_fallthru
      _
    // Predicated region
    $region18: #{tpu_custom_call.1} parent=1 // pred_check
      _
    $region19: #{tpu_custom_call.1} parent=1 // pred_check_branch
      %62 = sbr.rel (0) target = $region21
    $region20: #{tpu_custom_call.1} parent=1 // pred_region
      %s64 = ssub.s32 16, 16
      %65 = vsyncadd [#allocation6], %s64
      %s67 = sshll.u32 [#allocation7], 4
      %s68 = int_to_ptr.vmem [resolvable:$true] %s67
      %70 = dma.hbm_to_vmem [thread:$0]  %s4, 16, %s68, [#allocation6]
    $region21: #{tpu_custom_call.1} parent=1 // pred_fallthru
      _
    // Predicated region
    $region22: #{tpu_custom_call.1} parent=1 // pred_check
      _
    $region23: #{tpu_custom_call.1} parent=1 // pred_check_branch
      %72 = sbr.rel (0) target = $region25
    $region24: #{tpu_custom_call.1} parent=1 // pred_region
      _
    $region25: #{tpu_custom_call.1} parent=1 // pred_fallthru
      _
    // Predicated region
    $region26: #{tpu_custom_call.1} parent=1 // pred_check
      _
    $region27: #{tpu_custom_call.1} parent=1 // pred_check_branch
      %74 = sbr.rel (0) target = $region29
    $region28: #{tpu_custom_call.1} parent=1 // pred_region
      %s76 = ssub.s32 16, 16
      %77 = vsyncadd [#allocation9], %s76
      %s79 = sshll.u32 [#allocation8], 4
      %s80 = int_to_ptr.vmem [resolvable:$true] %s79
      %82 = dma.hbm_to_vmem [thread:$0]  %s6, 16, %s80, [#allocation9]
    $region29: #{tpu_custom_call.1} parent=1 // pred_fallthru
      _
    // Predicated region
    $region30: #{tpu_custom_call.1} parent=1 // pred_check
      _
    $region31: #{tpu_custom_call.1} parent=1 // pred_check_branch
      %84 = sbr.rel (0) target = $region33
    $region32: #{tpu_custom_call.1} parent=1 // pred_region
      _
    $region33: #{tpu_custom_call.1} parent=1 // pred_fallthru
      _
    // Predicated region
    $region34: #{tpu_custom_call.1} parent=1 // pred_check
      _
    $region35: #{tpu_custom_call.1} parent=1 // pred_check_branch
      %86 = sbr.rel (0) target = $region37
    $region36: #{tpu_custom_call.1} parent=1 // pred_region
      %s88 = ssub.s32 32, 32
      %89 = vsyncadd [#allocation9], %s88
      %s91 = sshll.u32 [#allocation10], 4
      %s92 = int_to_ptr.vmem [resolvable:$true] %s91
      %94 = dma.hbm_to_vmem [thread:$0]  %s8, 32, %s92, [#allocation9]
    $region37: #{tpu_custom_call.1} parent=1 // pred_fallthru
      _
    // Predicated region
    $region38: #{tpu_custom_call.1} parent=1 // pred_check
      _
    $region39: #{tpu_custom_call.1} parent=1 // pred_check_branch
      %96 = sbr.rel (0) target = $region41
    $region40: #{tpu_custom_call.1} parent=1 // pred_region
      _
    $region41: #{tpu_custom_call.1} parent=1 // pred_fallthru
      _
    // Predicated region
    $region42: #{tpu_custom_call.1} parent=1 // pred_check
      _
    $region43: #{tpu_custom_call.1} parent=1 // pred_check_branch
      %98 = sbr.rel (0) target = $region45
    $region44: #{tpu_custom_call.1} parent=1 // pred_region
      %s100 = ssub.s32 16, 16
      %101 = vsyncadd [#allocation12], %s100
      %s103 = sshll.u32 [#allocation11], 4
      %s104 = int_to_ptr.vmem [resolvable:$true] %s103
      %106 = dma.hbm_to_vmem [thread:$0]  %s10, 16, %s104, [#allocation12]
    $region45: #{tpu_custom_call.1} parent=1 // pred_fallthru
      _
    // Predicated region
    $region46: #{tpu_custom_call.1} parent=1 // pred_check
      _
    $region47: #{tpu_custom_call.1} parent=1 // pred_check_branch
      %108 = sbr.rel (0) target = $region49
    $region48: #{tpu_custom_call.1} parent=1 // pred_region
      _
    $region49: #{tpu_custom_call.1} parent=1 // pred_fallthru
      _
    // Predicated region
    $region50: #{tpu_custom_call.1} parent=1 // pred_check
      _
    $region51: #{tpu_custom_call.1} parent=1 // pred_check_branch
      %110 = sbr.rel (0) target = $region53
    $region52: #{tpu_custom_call.1} parent=1 // pred_region
      %s112 = ssub.s32 16, 16
      %113 = vsyncadd [#allocation12], %s112
      %s115 = sshll.u32 [#allocation13], 4
      %s116 = int_to_ptr.vmem [resolvable:$true] %s115
      %118 = dma.hbm_to_vmem [thread:$0]  %s12, 16, %s116, [#allocation12]
    $region53: #{tpu_custom_call.1} parent=1 // pred_fallthru
      _
    // Predicated region
    $region54: #{tpu_custom_call.1} parent=1 // pred_check
      _
    $region55: #{tpu_custom_call.1} parent=1 // pred_check_branch
      %120 = sbr.rel (0) target = $region57
    $region56: #{tpu_custom_call.1} parent=1 // pred_region
      _
    $region57: #{tpu_custom_call.1} parent=1 // pred_fallthru
      _
    // Predicated region
    $region58: #{tpu_custom_call.1} parent=1 // pred_check
      _
    $region59: #{tpu_custom_call.1} parent=1 // pred_check_branch
      %122 = sbr.rel (0) target = $region61
    $region60: #{tpu_custom_call.1} parent=1 // pred_region
      %s124 = ssub.s32 32, 32
      %125 = vsyncadd [#allocation15], %s124
      %s127 = sshll.u32 [#allocation14], 4
      %s128 = int_to_ptr.vmem [resolvable:$true] %s127
      %130 = dma.hbm_to_vmem [thread:$0]  %s14, 32, %s128, [#allocation15]
    $region61: #{tpu_custom_call.1} parent=1 // pred_fallthru
      _
    // Predicated region
    $region62: #{tpu_custom_call.1} parent=1 // pred_check
      _
    $region63: #{tpu_custom_call.1} parent=1 // pred_check_branch
      %132 = sbr.rel (0) target = $region65
    $region64: #{tpu_custom_call.1} parent=1 // pred_region
      _
    $region65: #{tpu_custom_call.1} parent=1 // pred_fallthru
      _
    // Predicated region
    $region66: #{tpu_custom_call.1} parent=1 // pred_check
      _
    $region67: #{tpu_custom_call.1} parent=1 // pred_check_branch
      %134 = sbr.rel (0) target = $region69
    $region68: #{tpu_custom_call.1} parent=1 // pred_region
      %s136 = ssub.s32 16, 16
      %137 = vsyncadd [#allocation15], %s136
      %s139 = sshll.u32 [#allocation16], 4
      %s140 = int_to_ptr.vmem [resolvable:$true] %s139
      %142 = dma.hbm_to_vmem [thread:$0]  %s16, 16, %s140, [#allocation15]
    $region69: #{tpu_custom_call.1} parent=1 // pred_fallthru
      _
    // Predicated region
    $region70: #{tpu_custom_call.1} parent=1 // pred_check
      _
    $region71: #{tpu_custom_call.1} parent=1 // pred_check_branch
      %144 = sbr.rel (0) target = $region73
    $region72: #{tpu_custom_call.1} parent=1 // pred_region
      _
    $region73: #{tpu_custom_call.1} parent=1 // pred_fallthru
      _
    // Predicated region
    $region74: #{tpu_custom_call.1} parent=1 // pred_check
      _
    $region75: #{tpu_custom_call.1} parent=1 // pred_check_branch
      %146 = sbr.rel (0) target = $region77
    $region76: #{tpu_custom_call.1} parent=1 // pred_region
      _
    $region77: #{tpu_custom_call.1} parent=1 // pred_fallthru
      _
    // Predicated region
    $region78: #{tpu_custom_call.1} parent=1 // pred_check
      _
    $region79: #{tpu_custom_call.1} parent=1 // pred_check_branch
      %148 = sbr.rel (0) target = $region81
    $region80: #{tpu_custom_call.1} parent=1 // pred_region
      %s150 = ssub.s32 1024, 1024
      %151 = vsyncadd [#allocation18], %s150
      %s152 = sshll.u32 [#allocation17], 4
      %s153 = int_to_ptr.vmem [resolvable:$true] %s152
      %158 = dma.hbm_to_vmem [thread:$0]  %s19, 1024, %s153, [#allocation18], 128, 128, 8
    $region81: #{tpu_custom_call.1} parent=1 // pred_fallthru
      _
    // Predicated region
    $region82: #{tpu_custom_call.1} parent=1 // pred_check
      _
    $region83: #{tpu_custom_call.1} parent=1 // pred_check_branch
      %160 = sbr.rel (0) target = $region85
    $region84: #{tpu_custom_call.1} parent=1 // pred_region
      _
    $region85: #{tpu_custom_call.1} parent=1 // pred_fallthru
      _
    // Predicated region
    $region86: #{tpu_custom_call.1} parent=1 // pred_check
      _
    $region87: #{tpu_custom_call.1} parent=1 // pred_check_branch
      %162 = sbr.rel (0) target = $region89
    $region88: #{tpu_custom_call.1} parent=1 // pred_region
      %s164 = ssub.s32 1024, 1024
      %165 = vsyncadd [#allocation18], %s164
      %s166 = sshll.u32 [#allocation19], 4
      %s167 = int_to_ptr.vmem [resolvable:$true] %s166
      %172 = dma.hbm_to_vmem [thread:$0]  %s21, 1024, %s167, [#allocation18], 128, 128, 8
    $region89: #{tpu_custom_call.1} parent=1 // pred_fallthru
      _
    // Predicated region
    $region90: #{tpu_custom_call.1} parent=1 // pred_check
      _
    $region91: #{tpu_custom_call.1} parent=1 // pred_check_branch
      %174 = sbr.rel (0) target = $region93
    $region92: #{tpu_custom_call.1} parent=1 // pred_region
      _
    $region93: #{tpu_custom_call.1} parent=1 // pred_fallthru
      _
    // Predicated region
    $region94: #{tpu_custom_call.1} parent=1 // pred_check
      _
    $region95: #{tpu_custom_call.1} parent=1 // pred_check_branch
      %176 = sbr.rel (0) target = $region97
    $region96: #{tpu_custom_call.1} parent=1 // pred_region
      _
    $region97: #{tpu_custom_call.1} parent=1 // pred_fallthru
      _
    // Predicated region
    $region98: #{tpu_custom_call.1} parent=1 // pred_check
      _
    $region99: #{tpu_custom_call.1} parent=1 // pred_check_branch
      %178 = sbr.rel (0) target = $region101
    $region100: #{tpu_custom_call.1} parent=1 // pred_region
      _
    $region101: #{tpu_custom_call.1} parent=1 // pred_fallthru
      _
    // Predicated region
    $region102: #{tpu_custom_call.1} parent=1 // pred_check
      _
    $region103: #{tpu_custom_call.1} parent=1 // pred_check_branch
      %180 = sbr.rel (0) target = $region105
    $region104: #{tpu_custom_call.1} parent=1 // pred_region
      %181 = dma.done [#allocation3], 128
    $region105: #{tpu_custom_call.1} parent=1 // pred_fallthru
      _
    // Predicated region
    $region106: #{tpu_custom_call.1} parent=1 // pred_check
      _
    $region107: #{tpu_custom_call.1} parent=1 // pred_check_branch
      %183 = sbr.rel (0) target = $region109
    $region108: #{tpu_custom_call.1} parent=1 // pred_region
      %184 = dma.done [#allocation6], 32
    $region109: #{tpu_custom_call.1} parent=1 // pred_fallthru
      _
    // Predicated region
    $region110: #{tpu_custom_call.1} parent=1 // pred_check
      _
    $region111: #{tpu_custom_call.1} parent=1 // pred_check_branch
      %186 = sbr.rel (0) target = $region113
    $region112: #{tpu_custom_call.1} parent=1 // pred_region
      %187 = dma.done [#allocation6], 16
    $region113: #{tpu_custom_call.1} parent=1 // pred_fallthru
      _
    // Predicated region
    $region114: #{tpu_custom_call.1} parent=1 // pred_check
      _
    $region115: #{tpu_custom_call.1} parent=1 // pred_check_branch
      %189 = sbr.rel (0) target = $region117
    $region116: #{tpu_custom_call.1} parent=1 // pred_region
      %190 = dma.done [#allocation9], 16
    $region117: #{tpu_custom_call.1} parent=1 // pred_fallthru
      _
    // Predicated region
    $region118: #{tpu_custom_call.1} parent=1 // pred_check
      _
    $region119: #{tpu_custom_call.1} parent=1 // pred_check_branch
      %192 = sbr.rel (0) target = $region121
    $region120: #{tpu_custom_call.1} parent=1 // pred_region
      %193 = dma.done [#allocation9], 32
    $region121: #{tpu_custom_call.1} parent=1 // pred_fallthru
      _
    // Predicated region
    $region122: #{tpu_custom_call.1} parent=1 // pred_check
      _
    $region123: #{tpu_custom_call.1} parent=1 // pred_check_branch
      %195 = sbr.rel (0) target = $region125
    $region124: #{tpu_custom_call.1} parent=1 // pred_region
      %196 = dma.done [#allocation12], 16
    $region125: #{tpu_custom_call.1} parent=1 // pred_fallthru
      _
    // Predicated region
    $region126: #{tpu_custom_call.1} parent=1 // pred_check
      _
    $region127: #{tpu_custom_call.1} parent=1 // pred_check_branch
      %198 = sbr.rel (0) target = $region129
    $region128: #{tpu_custom_call.1} parent=1 // pred_region
      %199 = dma.done [#allocation12], 16
    $region129: #{tpu_custom_call.1} parent=1 // pred_fallthru
      _
    // Predicated region
    $region130: #{tpu_custom_call.1} parent=1 // pred_check
      _
    $region131: #{tpu_custom_call.1} parent=1 // pred_check_branch
      %201 = sbr.rel (0) target = $region133
    $region132: #{tpu_custom_call.1} parent=1 // pred_region
      %202 = dma.done [#allocation15], 32
    $region133: #{tpu_custom_call.1} parent=1 // pred_fallthru
      _
    // Predicated region
    $region134: #{tpu_custom_call.1} parent=1 // pred_check
      _
    $region135: #{tpu_custom_call.1} parent=1 // pred_check_branch
      %204 = sbr.rel (0) target = $region137
    $region136: #{tpu_custom_call.1} parent=1 // pred_region
      %205 = dma.done [#allocation15], 16
    $region137: #{tpu_custom_call.1} parent=1 // pred_fallthru
      _
    // Predicated region
    $region138: #{tpu_custom_call.1} parent=1 // pred_check
      _
    $region139: #{tpu_custom_call.1} parent=1 // pred_check_branch
      %207 = sbr.rel (0) target = $region141
    $region140: #{tpu_custom_call.1} parent=1 // pred_region
      %208 = dma.done [#allocation18], 1024
    $region141: #{tpu_custom_call.1} parent=1 // pred_fallthru
      _
    // Predicated region
    $region142: #{tpu_custom_call.1} parent=1 // pred_check
      _
    $region143: #{tpu_custom_call.1} parent=1 // pred_check_branch
      %210 = sbr.rel (0) target = $region145
    $region144: #{tpu_custom_call.1} parent=1 // pred_region
      %211 = dma.done [#allocation18], 1024
    $region145: #{tpu_custom_call.1} parent=1 // pred_fallthru
      _
    %v212 = vld [vmem:[#allocation2] sm:$0xff]
    %v213 = vld [vmem:[%s1] sm:$0xff]
    %v214 = vld [vmem:[%s1 + $0x8] sm:$0xff]
    %v215 = vld [vmem:[%s1 + $0x10] sm:$0xff]
    %v216 = vld [vmem:[%s1 + $0x18] sm:$0xff]
    %v217 = vld [vmem:[%s1 + $0x20] sm:$0xff]
    %v218 = vld [vmem:[%s1 + $0x28] sm:$0xff]
    %v219 = vld [vmem:[%s1 + $0x30] sm:$0xff]
    %v220 = vld [vmem:[%s1 + $0x38] sm:$0xff]
    %v221 = vld [vmem:[#allocation5] sm:$0x3]
    %v222 = vld [vmem:[%s3] sm:$0xff]
    %v223 = vld [vmem:[%s3 + $0x8] sm:$0xff]
    %v224 = vld [vmem:[%s3 + $0x10] sm:$0xff]
    %v225 = vld [vmem:[%s3 + $0x18] sm:$0xff]
    %v226 = vld [vmem:[%s3 + $0x20] sm:$0xff]
    %v227 = vld [vmem:[%s3 + $0x28] sm:$0xff]
    %v228 = vld [vmem:[%s3 + $0x30] sm:$0xff]
    %v229 = vld [vmem:[%s3 + $0x38] sm:$0xff]
    %v230 = vld [vmem:[#allocation7] sm:$0x1]
    %v231 = vld [vmem:[%s5] sm:$0xff]
    %v232 = vld [vmem:[%s5 + $0x8] sm:$0xff]
    %v233 = vld [vmem:[%s5 + $0x10] sm:$0xff]
    %v234 = vld [vmem:[%s5 + $0x18] sm:$0xff]
    %v235 = vld [vmem:[%s5 + $0x20] sm:$0xff]
    %v236 = vld [vmem:[%s5 + $0x28] sm:$0xff]
    %v237 = vld [vmem:[%s5 + $0x30] sm:$0xff]
    %v238 = vld [vmem:[%s5 + $0x38] sm:$0xff]
    %v239 = vld [vmem:[%s5 + $0x40] sm:$0xff]
    %v240 = vld [vmem:[%s5 + $0x48] sm:$0xff]
    %v241 = vld [vmem:[%s5 + $0x50] sm:$0xff]
    %v242 = vld [vmem:[%s5 + $0x58] sm:$0xff]
    %v243 = vld [vmem:[%s5 + $0x60] sm:$0xff]
    %v244 = vld [vmem:[%s5 + $0x68] sm:$0xff]
    %v245 = vld [vmem:[%s5 + $0x70] sm:$0xff]
    %v246 = vld [vmem:[%s5 + $0x78] sm:$0xff]
    %v247 = vld [vmem:[#allocation8] sm:$0x1]
    %v249 = vlaneseq
    %v250 = vshrl.u32 %v249, 7
    %v251 = vsub.s32 0, %v250
    %v252 = vrot.slane %v221, %v251
    %v253 = vlaneseq
    %v254 = vshrl.u32 %v253, 7
    %v255 = vsub.s32 1, %v254
    %v256 = vrot.slane %v221, %v255
    %vm259 = vcmask 261120
    %v261 = vsel %vm259, %v212, 0
    %263 = vmatprep.subr.mxu0 %v214
    %264 = vmatpush1.msra.mxu0 %v213
    %265 = vmatprep.subr.mxu0 %v216
    %266 = vmatpush1.msra.mxu0 %v215
    %267 = vmatprep.subr.mxu0 %v218
    %268 = vmatpush1.msra.mxu0 %v217
    %269 = vmatprep.subr.mxu0 %v220
    %270 = vmatpush1.msra.mxu0 %v219
    %271 = vmatprep.subr.mxu0 0.0
    %272 = vmatpush1.msra.mxu0 0.0
    %273 = vmatprep.subr.mxu0 0.0
    %274 = vmatpush1.msra.mxu0 0.0
    %275 = vmatprep.subr.mxu0 0.0
    %276 = vmatpush1.msra.mxu0 0.0
    %277 = vmatprep.subr.mxu0 0.0
    %278 = vmatpush1.msra.mxu0 0.0
    %279 = vmatprep.subr.mxu0 0.0
    %280 = vmatpush1.msra.mxu0 0.0
    %281 = vmatprep.subr.mxu0 0.0
    %282 = vmatpush1.msra.mxu0 0.0
    %283 = vmatprep.subr.mxu0 0.0
    %284 = vmatpush1.msra.mxu0 0.0
    %285 = vmatprep.subr.mxu0 0.0
    %286 = vmatpush1.msra.mxu0 0.0
    %287 = vmatprep.subr.mxu0 0.0
    %288 = vmatpush1.msra.mxu0 0.0
    %289 = vmatprep.subr.mxu0 0.0
    %290 = vmatpush1.msra.mxu0 0.0
    %291 = vmatprep.subr.mxu0 0.0
    %292 = vmatpush1.msra.mxu0 0.0
    %293 = vmatprep.subr.mxu0 0.0
    %294 = vmatpush1.msra.mxu0 0.0
    %295 = vmatprep.subr.mxu0 0.0
    %296 = vmatpush1.msra.mxu0 0.0
    %297 = vmatprep.subr.mxu0 0.0
    %298 = vmatpush1.msra.mxu0 0.0
    %299 = vmatprep.subr.mxu0 0.0
    %300 = vmatpush1.msra.mxu0 0.0
    %301 = vmatprep.subr.mxu0 0.0
    %302 = vmatpush1.msra.mxu0 0.0
    %303 = vmatprep.subr.mxu0 0.0
    %304 = vmatpush1.msra.mxu0 0.0
    %305 = vmatprep.subr.mxu0 0.0
    %306 = vmatpush1.msra.mxu0 0.0
    %307 = vmatprep.subr.mxu0 0.0
    %308 = vmatpush1.msra.mxu0 0.0
    %309 = vmatprep.subr.mxu0 0.0
    %310 = vmatpush1.msra.mxu0 0.0
    %311 = vmatprep.subr.mxu0 0.0
    %312 = vmatpush1.msra.mxu0 0.0
    %313 = vmatprep.subr.mxu0 0.0
    %314 = vmatpush1.msra.mxu0 0.0
    %315 = vmatprep.subr.mxu0 0.0
    %316 = vmatpush1.msra.mxu0 0.0
    %317 = vmatprep.subr.mxu0 0.0
    %318 = vmatpush1.msra.mxu0 0.0
    %319 = vmatprep.subr.mxu0 0.0
    %320 = vmatpush1.msra.mxu0 0.0
    %321 = vmatprep.subr.mxu0 0.0
    %322 = vmatpush1.msra.mxu0 0.0
    %323 = vmatprep.subr.mxu0 0.0
    %324 = vmatpush1.msra.mxu0 0.0
    %325 = vmatprep.subr.mxu0 0.0
    %326 = vmatpush1.msra.mxu0 0.0
    %327 = vmatprep.mubr.f32.mxu0 0.0
    %328 = vmatmul.mubr.f32.gmra.mrb[0].mxu0 %v261
    %v329 = vpop.f32.mrb[0].mxu0
    %v330 = vadd.f32 %v252, %v329
    %v331 = vpop.f32.mrb[0].mxu0
    %v332 = vadd.f32 %v256, %v331
    %333 = vdwg.mxu0
    %335 = vrot.lane.b32.xlu0 %v330, 64
    %v336 = vpop.permute.xlu0 %335
    %vm337 = vcmask 523264
    %v338 = vsel %vm337, %v330, 0
    %v340 = vsel %vm337, %v336, 0
    %342 = vmatprep.subr.mxu0 0.0
    %343 = vmatpush1.xpose.msra.mxu0 %v340
    %344 = vmatprep.subr.mxu0 0.0
    %345 = vmatpush1.xpose.msra.mxu0 0.0
    %346 = vmatprep.subr.mxu0 0.0
    %347 = vmatpush1.xpose.msra.mxu0 0.0
    %348 = vmatprep.subr.mxu0 0.0
    %349 = vmatpush1.xpose.msra.mxu0 0.0
    %350 = vmatprep.subr.mxu0 0.0
    %351 = vmatpush1.xpose.msra.mxu0 0.0
    %352 = vmatprep.subr.mxu0 0.0
    %353 = vmatpush1.xpose.msra.mxu0 0.0
    %354 = vmatprep.subr.mxu0 0.0
    %355 = vmatpush1.xpose.msra.mxu0 0.0
    %356 = vmatprep.subr.mxu0 0.0
    %357 = vmatpush1.xpose.msra.mxu0 0.0
    %358 = vmatprep.subr.mxu0 0.0
    %359 = vmatpush1.xpose.msra.mxu0 0.0
    %360 = vmatprep.subr.mxu0 0.0
    %361 = vmatpush1.xpose.msra.mxu0 0.0
    %362 = vmatprep.subr.mxu0 0.0
    %363 = vmatpush1.xpose.msra.mxu0 0.0
    %364 = vmatprep.subr.mxu0 0.0
    %365 = vmatpush1.xpose.msra.mxu0 0.0
    %366 = vmatprep.subr.mxu0 0.0
    %367 = vmatpush1.xpose.msra.mxu0 0.0
    %368 = vmatprep.subr.mxu0 0.0
    %369 = vmatpush1.xpose.msra.mxu0 0.0
    %370 = vmatprep.subr.mxu0 0.0
    %371 = vmatpush1.xpose.msra.mxu0 0.0
    %372 = vmatprep.subr.mxu0 0.0
    %373 = vmatpush1.xpose.msra.mxu0 0.0
    %374 = vmatprep.subr.mxu0 0.0
    %375 = vmatpush1.xpose.msra.mxu0 0.0
    %376 = vmatprep.subr.mxu0 0.0
    %377 = vmatpush1.xpose.msra.mxu0 0.0
    %378 = vmatprep.subr.mxu0 0.0
    %379 = vmatpush1.xpose.msra.mxu0 0.0
    %380 = vmatprep.subr.mxu0 0.0
    %381 = vmatpush1.xpose.msra.mxu0 0.0
    %382 = vmatprep.subr.mxu0 0.0
    %383 = vmatpush1.xpose.msra.mxu0 0.0
    %384 = vmatprep.subr.mxu0 0.0
    %385 = vmatpush1.xpose.msra.mxu0 0.0
    %386 = vmatprep.subr.mxu0 0.0
    %387 = vmatpush1.xpose.msra.mxu0 0.0
    %388 = vmatprep.subr.mxu0 0.0
    %389 = vmatpush1.xpose.msra.mxu0 0.0
    %390 = vmatprep.subr.mxu0 0.0
    %391 = vmatpush1.xpose.msra.mxu0 0.0
    %392 = vmatprep.subr.mxu0 0.0
    %393 = vmatpush1.xpose.msra.mxu0 0.0
    %394 = vmatprep.subr.mxu0 0.0
    %395 = vmatpush1.xpose.msra.mxu0 0.0
    %396 = vmatprep.subr.mxu0 0.0
    %397 = vmatpush1.xpose.msra.mxu0 0.0
    %398 = vmatprep.subr.mxu0 0.0
    %399 = vmatpush1.xpose.msra.mxu0 0.0
    %400 = vmatprep.subr.mxu0 0.0
    %401 = vmatpush1.xpose.msra.mxu0 0.0
    %402 = vmatprep.subr.mxu0 0.0
    %403 = vmatpush1.xpose.msra.mxu0 0.0
    %404 = vmatprep.subr.mxu0 0.0
    %405 = vmatpush1.xpose.msra.mxu0 0.0
    %406 = vmatprep.mubr.f32.mxu0 0.0
    %407 = vmatmul.mubr.f32.gmra.mrb[0].mxu0 %v338
    %v408 = vpop.f32.mrb[0].mxu0
    %v409 = vadd.f32 0.0, %v408
    %v410 = vpop.f32.mrb[0].mxu0
    %411 = vdwg.mxu0
    %v412 = vmul.f32 %v409, 0.125
    %vm413 = vcmask 64512
    %v414 = vsel %vm413, %v412, -inf
    %415 = vmax.xlane.f32.xlu0 %v414
    %v416 = vpop.xlane.xlu0 %415
    %v417 = vsub.f32 %v412, %v416
    %v418 = vmul.f32 %v417, 1.442695
    %v419 = vpow.pop %v418
    %v420 = vsel %vm413, %v419, 0.0
    %421 = vadd.xlane.f32.xlu0 %v420
    %v422 = vpop.xlane.xlu0 %421
    %v423 = vrcp.pop %v422
    %v424 = vmul.f32 %v419, %v423
    %v426 = vsel %vm413, %v424, 0
    %428 = vmatprep.subr.mxu0 0.0
    %429 = vmatpush1.msra.mxu0 %v332
    %430 = vmatprep.subr.mxu0 0.0
    %431 = vmatpush1.msra.mxu0 0.0
    %432 = vmatprep.subr.mxu0 0.0
    %433 = vmatpush1.msra.mxu0 0.0
    %434 = vmatprep.subr.mxu0 0.0
    %435 = vmatpush1.msra.mxu0 0.0
    %436 = vmatprep.subr.mxu0 0.0
    %437 = vmatpush1.msra.mxu0 0.0
    %438 = vmatprep.subr.mxu0 0.0
    %439 = vmatpush1.msra.mxu0 0.0
    %440 = vmatprep.subr.mxu0 0.0
    %441 = vmatpush1.msra.mxu0 0.0
    %442 = vmatprep.subr.mxu0 0.0
    %443 = vmatpush1.msra.mxu0 0.0
    %444 = vmatprep.subr.mxu0 0.0
    %445 = vmatpush1.msra.mxu0 0.0
    %446 = vmatprep.subr.mxu0 0.0
    %447 = vmatpush1.msra.mxu0 0.0
    %448 = vmatprep.subr.mxu0 0.0
    %449 = vmatpush1.msra.mxu0 0.0
    %450 = vmatprep.subr.mxu0 0.0
    %451 = vmatpush1.msra.mxu0 0.0
    %452 = vmatprep.subr.mxu0 0.0
    %453 = vmatpush1.msra.mxu0 0.0
    %454 = vmatprep.subr.mxu0 0.0
    %455 = vmatpush1.msra.mxu0 0.0
    %456 = vmatprep.subr.mxu0 0.0
    %457 = vmatpush1.msra.mxu0 0.0
    %458 = vmatprep.subr.mxu0 0.0
    %459 = vmatpush1.msra.mxu0 0.0
    %460 = vmatprep.subr.mxu0 0.0
    %461 = vmatpush1.msra.mxu0 0.0
    %462 = vmatprep.subr.mxu0 0.0
    %463 = vmatpush1.msra.mxu0 0.0
    %464 = vmatprep.subr.mxu0 0.0
    %465 = vmatpush1.msra.mxu0 0.0
    %466 = vmatprep.subr.mxu0 0.0
    %467 = vmatpush1.msra.mxu0 0.0
    %468 = vmatprep.subr.mxu0 0.0
    %469 = vmatpush1.msra.mxu0 0.0
    %470 = vmatprep.subr.mxu0 0.0
    %471 = vmatpush1.msra.mxu0 0.0
    %472 = vmatprep.subr.mxu0 0.0
    %473 = vmatpush1.msra.mxu0 0.0
    %474 = vmatprep.subr.mxu0 0.0
    %475 = vmatpush1.msra.mxu0 0.0
    %476 = vmatprep.subr.mxu0 0.0
    %477 = vmatpush1.msra.mxu0 0.0
    %478 = vmatprep.subr.mxu0 0.0
    %479 = vmatpush1.msra.mxu0 0.0
    %480 = vmatprep.subr.mxu0 0.0
    %481 = vmatpush1.msra.mxu0 0.0
    %482 = vmatprep.subr.mxu0 0.0
    %483 = vmatpush1.msra.mxu0 0.0
    %484 = vmatprep.subr.mxu0 0.0
    %485 = vmatpush1.msra.mxu0 0.0
    %486 = vmatprep.subr.mxu0 0.0
    %487 = vmatpush1.msra.mxu0 0.0
    %488 = vmatprep.subr.mxu0 0.0
    %489 = vmatpush1.msra.mxu0 0.0
    %490 = vmatprep.subr.mxu0 0.0
    %491 = vmatpush1.msra.mxu0 0.0
    %492 = vmatprep.mubr.f32.mxu0 0.0
    %493 = vmatmul.mubr.f32.gmra.mrb[0].mxu0 %v426
    %v494 = vpop.f32.mrb[0].mxu0
    %v495 = vadd.f32 %v330, %v494
    %v496 = vpop.f32.mrb[0].mxu0
    %497 = vdwg.mxu0
    %v498 = vsel %vm337, %v495, 0.0
    %499 = vadd.xlane.f32.xlu0 %v498
    %v500 = vpop.xlane.xlu0 %499
    %v501 = vrcp.pop 64.0
    %v502 = vmul.f32 %v500, %v501
    %v503 = vsub.f32 %v495, %v502
    %v504 = vmul.f32 %v503, %v503
    %v505 = vsel %vm337, %v504, 0.0
    %506 = vadd.xlane.f32.xlu0 %v505
    %v507 = vpop.xlane.xlu0 %506
    %v508 = vmul.f32 %v507, %v501
    %v509 = vadd.f32 %v508, 1e-05
    %v510 = vrsqrt.pop %v509
    %v511 = vmul.f32 %v503, %v510
    %v513 = vlaneseq
    %v514 = vshrl.u32 %v513, 7
    %v515 = vsub.s32 0, %v514
    %v516 = vrot.slane %v230, %v515
    %v519 = vsel %vm337, %v511, 0
    %521 = vmatprep.subr.mxu0 0.0
    %522 = vmatpush1.msra.mxu0 %v222
    %523 = vmatprep.subr.mxu0 0.0
    %524 = vmatpush1.msra.mxu0 %v223
    %525 = vmatprep.subr.mxu0 0.0
    %526 = vmatpush1.msra.mxu0 %v224
    %527 = vmatprep.subr.mxu0 0.0
    %528 = vmatpush1.msra.mxu0 %v225
    %529 = vmatprep.subr.mxu0 0.0
    %530 = vmatpush1.msra.mxu0 %v226
    %531 = vmatprep.subr.mxu0 0.0
    %532 = vmatpush1.msra.mxu0 %v227
    %533 = vmatprep.subr.mxu0 0.0
    %534 = vmatpush1.msra.mxu0 %v228
    %535 = vmatprep.subr.mxu0 0.0
    %536 = vmatpush1.msra.mxu0 %v229
    %537 = vmatprep.subr.mxu0 0.0
    %538 = vmatpush1.msra.mxu0 0.0
    %539 = vmatprep.subr.mxu0 0.0
    %540 = vmatpush1.msra.mxu0 0.0
    %541 = vmatprep.subr.mxu0 0.0
    %542 = vmatpush1.msra.mxu0 0.0
    %543 = vmatprep.subr.mxu0 0.0
    %544 = vmatpush1.msra.mxu0 0.0
    %545 = vmatprep.subr.mxu0 0.0
    %546 = vmatpush1.msra.mxu0 0.0
    %547 = vmatprep.subr.mxu0 0.0
    %548 = vmatpush1.msra.mxu0 0.0
    %549 = vmatprep.subr.mxu0 0.0
    %550 = vmatpush1.msra.mxu0 0.0
    %551 = vmatprep.subr.mxu0 0.0
    %552 = vmatpush1.msra.mxu0 0.0
    %553 = vmatprep.subr.mxu0 0.0
    %554 = vmatpush1.msra.mxu0 0.0
    %555 = vmatprep.subr.mxu0 0.0
    %556 = vmatpush1.msra.mxu0 0.0
    %557 = vmatprep.subr.mxu0 0.0
    %558 = vmatpush1.msra.mxu0 0.0
    %559 = vmatprep.subr.mxu0 0.0
    %560 = vmatpush1.msra.mxu0 0.0
    %561 = vmatprep.subr.mxu0 0.0
    %562 = vmatpush1.msra.mxu0 0.0
    %563 = vmatprep.subr.mxu0 0.0
    %564 = vmatpush1.msra.mxu0 0.0
    %565 = vmatprep.subr.mxu0 0.0
    %566 = vmatpush1.msra.mxu0 0.0
    %567 = vmatprep.subr.mxu0 0.0
    %568 = vmatpush1.msra.mxu0 0.0
    %569 = vmatprep.subr.mxu0 0.0
    %570 = vmatpush1.msra.mxu0 0.0
    %571 = vmatprep.subr.mxu0 0.0
    %572 = vmatpush1.msra.mxu0 0.0
    %573 = vmatprep.subr.mxu0 0.0
    %574 = vmatpush1.msra.mxu0 0.0
    %575 = vmatprep.subr.mxu0 0.0
    %576 = vmatpush1.msra.mxu0 0.0
    %577 = vmatprep.subr.mxu0 0.0
    %578 = vmatpush1.msra.mxu0 0.0
    %579 = vmatprep.subr.mxu0 0.0
    %580 = vmatpush1.msra.mxu0 0.0
    %581 = vmatprep.subr.mxu0 0.0
    %582 = vmatpush1.msra.mxu0 0.0
    %583 = vmatprep.subr.mxu0 0.0
    %584 = vmatpush1.msra.mxu0 0.0
    %585 = vmatprep.mubr.f32.mxu0 0.0
    %586 = vmatmul.mubr.f32.gmra.mrb[0].mxu0 %v519
    %v587 = vpop.f32.mrb[0].mxu0
    %v588 = vadd.f32 %v516, %v587
    %v589 = vpop.f32.mrb[0].mxu0
    %590 = vdwg.mxu0
    %v591 = vmax.f32 %v588, 0.0
    %592 = vmatprep.subr.mxu0 0.0
    %593 = vmatpush1.msra.mxu0 %v231
    %594 = vmatprep.subr.mxu0 0.0
    %595 = vmatpush1.msra.mxu0 %v232
    %596 = vmatprep.subr.mxu0 0.0
    %597 = vmatpush1.msra.mxu0 %v233
    %598 = vmatprep.subr.mxu0 0.0
    %599 = vmatpush1.msra.mxu0 %v234
    %600 = vmatprep.subr.mxu0 0.0
    %601 = vmatpush1.msra.mxu0 %v235
    %602 = vmatprep.subr.mxu0 0.0
    %603 = vmatpush1.msra.mxu0 %v236
    %604 = vmatprep.subr.mxu0 0.0
    %605 = vmatpush1.msra.mxu0 %v237
    %606 = vmatprep.subr.mxu0 0.0
    %607 = vmatpush1.msra.mxu0 %v238
    %608 = vmatprep.subr.mxu0 0.0
    %609 = vmatpush1.msra.mxu0 %v239
    %610 = vmatprep.subr.mxu0 0.0
    %611 = vmatpush1.msra.mxu0 %v240
    %612 = vmatprep.subr.mxu0 0.0
    %613 = vmatpush1.msra.mxu0 %v241
    %614 = vmatprep.subr.mxu0 0.0
    %615 = vmatpush1.msra.mxu0 %v242
    %616 = vmatprep.subr.mxu0 0.0
    %617 = vmatpush1.msra.mxu0 %v243
    %618 = vmatprep.subr.mxu0 0.0
    %619 = vmatpush1.msra.mxu0 %v244
    %620 = vmatprep.subr.mxu0 0.0
    %621 = vmatpush1.msra.mxu0 %v245
    %622 = vmatprep.subr.mxu0 0.0
    %623 = vmatpush1.msra.mxu0 %v246
    %624 = vmatprep.subr.mxu0 0.0
    %625 = vmatpush1.msra.mxu0 0.0
    %626 = vmatprep.subr.mxu0 0.0
    %627 = vmatpush1.msra.mxu0 0.0
    %628 = vmatprep.subr.mxu0 0.0
    %629 = vmatpush1.msra.mxu0 0.0
    %630 = vmatprep.subr.mxu0 0.0
    %631 = vmatpush1.msra.mxu0 0.0
    %632 = vmatprep.subr.mxu0 0.0
    %633 = vmatpush1.msra.mxu0 0.0
    %634 = vmatprep.subr.mxu0 0.0
    %635 = vmatpush1.msra.mxu0 0.0
    %636 = vmatprep.subr.mxu0 0.0
    %637 = vmatpush1.msra.mxu0 0.0
    %638 = vmatprep.subr.mxu0 0.0
    %639 = vmatpush1.msra.mxu0 0.0
    %640 = vmatprep.subr.mxu0 0.0
    %641 = vmatpush1.msra.mxu0 0.0
    %642 = vmatprep.subr.mxu0 0.0
    %643 = vmatpush1.msra.mxu0 0.0
    %644 = vmatprep.subr.mxu0 0.0
    %645 = vmatpush1.msra.mxu0 0.0
    %646 = vmatprep.subr.mxu0 0.0
    %647 = vmatpush1.msra.mxu0 0.0
    %648 = vmatprep.subr.mxu0 0.0
    %649 = vmatpush1.msra.mxu0 0.0
    %650 = vmatprep.subr.mxu0 0.0
    %651 = vmatpush1.msra.mxu0 0.0
    %652 = vmatprep.subr.mxu0 0.0
    %653 = vmatpush1.msra.mxu0 0.0
    %654 = vmatprep.subr.mxu0 0.0
    %655 = vmatpush1.msra.mxu0 0.0
    %656 = vmatprep.mubr.f32.mxu0 0.0
    %657 = vmatmul.mubr.f32.gmra.mrb[0].mxu0 %v591
    %v658 = vpop.f32.mrb[0].mxu0
    %v659 = vadd.f32 0.0, %v658
    %v660 = vpop.f32.mrb[0].mxu0
    %661 = vdwg.mxu0
    %v662 = vadd.f32 %v511, %v659
    %v664 = vlaneseq
    %v665 = vshrl.u32 %v664, 7
    %v666 = vsub.s32 0, %v665
    %v667 = vrot.slane %v247, %v666
    %v669 = vadd.f32 %v662, %v667
    %v670 = vsel %vm337, %v669, 0.0
    %671 = vadd.xlane.f32.xlu0 %v670
    %v672 = vpop.xlane.xlu0 %671
    %v673 = vmul.f32 %v672, %v501
    %v674 = vsub.f32 %v669, %v673
    %v675 = vmul.f32 %v674, %v674
    %v676 = vsel %vm337, %v675, 0.0
    %677 = vadd.xlane.f32.xlu0 %v676
    %v678 = vpop.xlane.xlu0 %677
    %v679 = vmul.f32 %v678, %v501
    %v680 = vadd.f32 %v679, 1e-05
    %v681 = vrsqrt.pop %v680
    %v682 = vmul.f32 %v674, %v681
    %v683 = vld [vmem:[%s7] sm:$0xff]
    %v684 = vld [vmem:[%s7 + $0x8] sm:$0xff]
    %v685 = vld [vmem:[%s7 + $0x10] sm:$0xff]
    %v686 = vld [vmem:[%s7 + $0x18] sm:$0xff]
    %v687 = vld [vmem:[%s7 + $0x20] sm:$0xff]
    %v688 = vld [vmem:[%s7 + $0x28] sm:$0xff]
    %v689 = vld [vmem:[%s7 + $0x30] sm:$0xff]
    %v690 = vld [vmem:[%s7 + $0x38] sm:$0xff]
    %v691 = vld [vmem:[%s7 + $0x40] sm:$0xff]
    %v692 = vld [vmem:[%s7 + $0x48] sm:$0xff]
    %v693 = vld [vmem:[%s7 + $0x50] sm:$0xff]
    %v694 = vld [vmem:[%s7 + $0x58] sm:$0xff]
    %v695 = vld [vmem:[%s7 + $0x60] sm:$0xff]
    %v696 = vld [vmem:[%s7 + $0x68] sm:$0xff]
    %v697 = vld [vmem:[%s7 + $0x70] sm:$0xff]
    %v698 = vld [vmem:[%s7 + $0x78] sm:$0xff]
    %v699 = vld [vmem:[#allocation10] sm:$0x3]
    %v700 = vld [vmem:[%s9] sm:$0xff]
    %v701 = vld [vmem:[%s9 + $0x8] sm:$0xff]
    %v702 = vld [vmem:[%s9 + $0x10] sm:$0xff]
    %v703 = vld [vmem:[%s9 + $0x18] sm:$0xff]
    %v704 = vld [vmem:[%s9 + $0x20] sm:$0xff]
    %v705 = vld [vmem:[%s9 + $0x28] sm:$0xff]
    %v706 = vld [vmem:[%s9 + $0x30] sm:$0xff]
    %v707 = vld [vmem:[%s9 + $0x38] sm:$0xff]
    %v708 = vld [vmem:[#allocation11] sm:$0x1]
    %v709 = vld [vmem:[%s11] sm:$0xff]
    %v710 = vld [vmem:[%s11 + $0x8] sm:$0xff]
    %v711 = vld [vmem:[%s11 + $0x10] sm:$0xff]
    %v712 = vld [vmem:[%s11 + $0x18] sm:$0xff]
    %v713 = vld [vmem:[%s11 + $0x20] sm:$0xff]
    %v714 = vld [vmem:[%s11 + $0x28] sm:$0xff]
    %v715 = vld [vmem:[%s11 + $0x30] sm:$0xff]
    %v716 = vld [vmem:[%s11 + $0x38] sm:$0xff]
    %v717 = vld [vmem:[%s11 + $0x40] sm:$0xff]
    %v718 = vld [vmem:[%s11 + $0x48] sm:$0xff]
    %v719 = vld [vmem:[%s11 + $0x50] sm:$0xff]
    %v720 = vld [vmem:[%s11 + $0x58] sm:$0xff]
    %v721 = vld [vmem:[%s11 + $0x60] sm:$0xff]
    %v722 = vld [vmem:[%s11 + $0x68] sm:$0xff]
    %v723 = vld [vmem:[%s11 + $0x70] sm:$0xff]
    %v724 = vld [vmem:[%s11 + $0x78] sm:$0xff]
    %v725 = vld [vmem:[#allocation13] sm:$0x1]
    %v727 = vlaneseq
    %v728 = vshrl.u32 %v727, 7
    %v729 = vsub.s32 0, %v728
    %v730 = vrot.slane %v699, %v729
    %v731 = vlaneseq
    %v732 = vshrl.u32 %v731, 7
    %v733 = vsub.s32 1, %v732
    %v734 = vrot.slane %v699, %v733
    %v738 = vsel %vm337, %v682, 0
    %740 = vmatprep.subr.mxu0 %v684
    %741 = vmatpush1.msra.mxu0 %v683
    %742 = vmatprep.subr.mxu0 %v686
    %743 = vmatpush1.msra.mxu0 %v685
    %744 = vmatprep.subr.mxu0 %v688
    %745 = vmatpush1.msra.mxu0 %v687
    %746 = vmatprep.subr.mxu0 %v690
    %747 = vmatpush1.msra.mxu0 %v689
    %748 = vmatprep.subr.mxu0 %v692
    %749 = vmatpush1.msra.mxu0 %v691
    %750 = vmatprep.subr.mxu0 %v694
    %751 = vmatpush1.msra.mxu0 %v693
    %752 = vmatprep.subr.mxu0 %v696
    %753 = vmatpush1.msra.mxu0 %v695
    %754 = vmatprep.subr.mxu0 %v698
    %755 = vmatpush1.msra.mxu0 %v697
    %756 = vmatprep.subr.mxu0 0.0
    %757 = vmatpush1.msra.mxu0 0.0
    %758 = vmatprep.subr.mxu0 0.0
    %759 = vmatpush1.msra.mxu0 0.0
    %760 = vmatprep.subr.mxu0 0.0
    %761 = vmatpush1.msra.mxu0 0.0
    %762 = vmatprep.subr.mxu0 0.0
    %763 = vmatpush1.msra.mxu0 0.0
    %764 = vmatprep.subr.mxu0 0.0
    %765 = vmatpush1.msra.mxu0 0.0
    %766 = vmatprep.subr.mxu0 0.0
    %767 = vmatpush1.msra.mxu0 0.0
    %768 = vmatprep.subr.mxu0 0.0
    %769 = vmatpush1.msra.mxu0 0.0
    %770 = vmatprep.subr.mxu0 0.0
    %771 = vmatpush1.msra.mxu0 0.0
    %772 = vmatprep.subr.mxu0 0.0
    %773 = vmatpush1.msra.mxu0 0.0
    %774 = vmatprep.subr.mxu0 0.0
    %775 = vmatpush1.msra.mxu0 0.0
    %776 = vmatprep.subr.mxu0 0.0
    %777 = vmatpush1.msra.mxu0 0.0
    %778 = vmatprep.subr.mxu0 0.0
    %779 = vmatpush1.msra.mxu0 0.0
    %780 = vmatprep.subr.mxu0 0.0
    %781 = vmatpush1.msra.mxu0 0.0
    %782 = vmatprep.subr.mxu0 0.0
    %783 = vmatpush1.msra.mxu0 0.0
    %784 = vmatprep.subr.mxu0 0.0
    %785 = vmatpush1.msra.mxu0 0.0
    %786 = vmatprep.subr.mxu0 0.0
    %787 = vmatpush1.msra.mxu0 0.0
    %788 = vmatprep.subr.mxu0 0.0
    %789 = vmatpush1.msra.mxu0 0.0
    %790 = vmatprep.subr.mxu0 0.0
    %791 = vmatpush1.msra.mxu0 0.0
    %792 = vmatprep.subr.mxu0 0.0
    %793 = vmatpush1.msra.mxu0 0.0
    %794 = vmatprep.subr.mxu0 0.0
    %795 = vmatpush1.msra.mxu0 0.0
    %796 = vmatprep.subr.mxu0 0.0
    %797 = vmatpush1.msra.mxu0 0.0
    %798 = vmatprep.subr.mxu0 0.0
    %799 = vmatpush1.msra.mxu0 0.0
    %800 = vmatprep.subr.mxu0 0.0
    %801 = vmatpush1.msra.mxu0 0.0
    %802 = vmatprep.subr.mxu0 0.0
    %803 = vmatpush1.msra.mxu0 0.0
    %804 = vmatprep.mubr.f32.mxu0 0.0
    %805 = vmatmul.mubr.f32.gmra.mrb[0].mxu0 %v738
    %v806 = vpop.f32.mrb[0].mxu0
    %v807 = vadd.f32 %v730, %v806
    %v808 = vpop.f32.mrb[0].mxu0
    %v809 = vadd.f32 %v734, %v808
    %810 = vdwg.mxu0
    %812 = vrot.lane.b32.xlu0 %v807, 64
    %v813 = vpop.permute.xlu0 %812
    %v814 = vsel %vm337, %v807, 0
    %v816 = vsel %vm337, %v813, 0
    %818 = vmatprep.subr.mxu0 0.0
    %819 = vmatpush1.xpose.msra.mxu0 %v816
    %820 = vmatprep.subr.mxu0 0.0
    %821 = vmatpush1.xpose.msra.mxu0 0.0
    %822 = vmatprep.subr.mxu0 0.0
    %823 = vmatpush1.xpose.msra.mxu0 0.0
    %824 = vmatprep.subr.mxu0 0.0
    %825 = vmatpush1.xpose.msra.mxu0 0.0
    %826 = vmatprep.subr.mxu0 0.0
    %827 = vmatpush1.xpose.msra.mxu0 0.0
    %828 = vmatprep.subr.mxu0 0.0
    %829 = vmatpush1.xpose.msra.mxu0 0.0
    %830 = vmatprep.subr.mxu0 0.0
    %831 = vmatpush1.xpose.msra.mxu0 0.0
    %832 = vmatprep.subr.mxu0 0.0
    %833 = vmatpush1.xpose.msra.mxu0 0.0
    %834 = vmatprep.subr.mxu0 0.0
    %835 = vmatpush1.xpose.msra.mxu0 0.0
    %836 = vmatprep.subr.mxu0 0.0
    %837 = vmatpush1.xpose.msra.mxu0 0.0
    %838 = vmatprep.subr.mxu0 0.0
    %839 = vmatpush1.xpose.msra.mxu0 0.0
    %840 = vmatprep.subr.mxu0 0.0
    %841 = vmatpush1.xpose.msra.mxu0 0.0
    %842 = vmatprep.subr.mxu0 0.0
    %843 = vmatpush1.xpose.msra.mxu0 0.0
    %844 = vmatprep.subr.mxu0 0.0
    %845 = vmatpush1.xpose.msra.mxu0 0.0
    %846 = vmatprep.subr.mxu0 0.0
    %847 = vmatpush1.xpose.msra.mxu0 0.0
    %848 = vmatprep.subr.mxu0 0.0
    %849 = vmatpush1.xpose.msra.mxu0 0.0
    %850 = vmatprep.subr.mxu0 0.0
    %851 = vmatpush1.xpose.msra.mxu0 0.0
    %852 = vmatprep.subr.mxu0 0.0
    %853 = vmatpush1.xpose.msra.mxu0 0.0
    %854 = vmatprep.subr.mxu0 0.0
    %855 = vmatpush1.xpose.msra.mxu0 0.0
    %856 = vmatprep.subr.mxu0 0.0
    %857 = vmatpush1.xpose.msra.mxu0 0.0
    %858 = vmatprep.subr.mxu0 0.0
    %859 = vmatpush1.xpose.msra.mxu0 0.0
    %860 = vmatprep.subr.mxu0 0.0
    %861 = vmatpush1.xpose.msra.mxu0 0.0
    %862 = vmatprep.subr.mxu0 0.0
    %863 = vmatpush1.xpose.msra.mxu0 0.0
    %864 = vmatprep.subr.mxu0 0.0
    %865 = vmatpush1.xpose.msra.mxu0 0.0
    %866 = vmatprep.subr.mxu0 0.0
    %867 = vmatpush1.xpose.msra.mxu0 0.0
    %868 = vmatprep.subr.mxu0 0.0
    %869 = vmatpush1.xpose.msra.mxu0 0.0
    %870 = vmatprep.subr.mxu0 0.0
    %871 = vmatpush1.xpose.msra.mxu0 0.0
    %872 = vmatprep.subr.mxu0 0.0
    %873 = vmatpush1.xpose.msra.mxu0 0.0
    %874 = vmatprep.subr.mxu0 0.0
    %875 = vmatpush1.xpose.msra.mxu0 0.0
    %876 = vmatprep.subr.mxu0 0.0
    %877 = vmatpush1.xpose.msra.mxu0 0.0
    %878 = vmatprep.subr.mxu0 0.0
    %879 = vmatpush1.xpose.msra.mxu0 0.0
    %880 = vmatprep.subr.mxu0 0.0
    %881 = vmatpush1.xpose.msra.mxu0 0.0
    %882 = vmatprep.mubr.f32.mxu0 0.0
    %883 = vmatmul.mubr.f32.gmra.mrb[0].mxu0 %v814
    %v884 = vpop.f32.mrb[0].mxu0
    %v885 = vadd.f32 0.0, %v884
    %v886 = vpop.f32.mrb[0].mxu0
    %887 = vdwg.mxu0
    %v888 = vmul.f32 %v885, 0.125
    %v889 = vsel %vm413, %v888, -inf
    %890 = vmax.xlane.f32.xlu0 %v889
    %v891 = vpop.xlane.xlu0 %890
    %v892 = vsub.f32 %v888, %v891
    %v893 = vmul.f32 %v892, 1.442695
    %v894 = vpow.pop %v893
    %v895 = vsel %vm413, %v894, 0.0
    %896 = vadd.xlane.f32.xlu0 %v895
    %v897 = vpop.xlane.xlu0 %896
    %v898 = vrcp.pop %v897
    %v899 = vmul.f32 %v894, %v898
    %v901 = vsel %vm413, %v899, 0
    %903 = vmatprep.subr.mxu0 0.0
    %904 = vmatpush1.msra.mxu0 %v809
    %905 = vmatprep.subr.mxu0 0.0
    %906 = vmatpush1.msra.mxu0 0.0
    %907 = vmatprep.subr.mxu0 0.0
    %908 = vmatpush1.msra.mxu0 0.0
    %909 = vmatprep.subr.mxu0 0.0
    %910 = vmatpush1.msra.mxu0 0.0
    %911 = vmatprep.subr.mxu0 0.0
    %912 = vmatpush1.msra.mxu0 0.0
    %913 = vmatprep.subr.mxu0 0.0
    %914 = vmatpush1.msra.mxu0 0.0
    %915 = vmatprep.subr.mxu0 0.0
    %916 = vmatpush1.msra.mxu0 0.0
    %917 = vmatprep.subr.mxu0 0.0
    %918 = vmatpush1.msra.mxu0 0.0
    %919 = vmatprep.subr.mxu0 0.0
    %920 = vmatpush1.msra.mxu0 0.0
    %921 = vmatprep.subr.mxu0 0.0
    %922 = vmatpush1.msra.mxu0 0.0
    %923 = vmatprep.subr.mxu0 0.0
    %924 = vmatpush1.msra.mxu0 0.0
    %925 = vmatprep.subr.mxu0 0.0
    %926 = vmatpush1.msra.mxu0 0.0
    %927 = vmatprep.subr.mxu0 0.0
    %928 = vmatpush1.msra.mxu0 0.0
    %929 = vmatprep.subr.mxu0 0.0
    %930 = vmatpush1.msra.mxu0 0.0
    %931 = vmatprep.subr.mxu0 0.0
    %932 = vmatpush1.msra.mxu0 0.0
    %933 = vmatprep.subr.mxu0 0.0
    %934 = vmatpush1.msra.mxu0 0.0
    %935 = vmatprep.subr.mxu0 0.0
    %936 = vmatpush1.msra.mxu0 0.0
    %937 = vmatprep.subr.mxu0 0.0
    %938 = vmatpush1.msra.mxu0 0.0
    %939 = vmatprep.subr.mxu0 0.0
    %940 = vmatpush1.msra.mxu0 0.0
    %941 = vmatprep.subr.mxu0 0.0
    %942 = vmatpush1.msra.mxu0 0.0
    %943 = vmatprep.subr.mxu0 0.0
    %944 = vmatpush1.msra.mxu0 0.0
    %945 = vmatprep.subr.mxu0 0.0
    %946 = vmatpush1.msra.mxu0 0.0
    %947 = vmatprep.subr.mxu0 0.0
    %948 = vmatpush1.msra.mxu0 0.0
    %949 = vmatprep.subr.mxu0 0.0
    %950 = vmatpush1.msra.mxu0 0.0
    %951 = vmatprep.subr.mxu0 0.0
    %952 = vmatpush1.msra.mxu0 0.0
    %953 = vmatprep.subr.mxu0 0.0
    %954 = vmatpush1.msra.mxu0 0.0
    %955 = vmatprep.subr.mxu0 0.0
    %956 = vmatpush1.msra.mxu0 0.0
    %957 = vmatprep.subr.mxu0 0.0
    %958 = vmatpush1.msra.mxu0 0.0
    %959 = vmatprep.subr.mxu0 0.0
    %960 = vmatpush1.msra.mxu0 0.0
    %961 = vmatprep.subr.mxu0 0.0
    %962 = vmatpush1.msra.mxu0 0.0
    %963 = vmatprep.subr.mxu0 0.0
    %964 = vmatpush1.msra.mxu0 0.0
    %965 = vmatprep.subr.mxu0 0.0
    %966 = vmatpush1.msra.mxu0 0.0
    %967 = vmatprep.mubr.f32.mxu0 0.0
    %968 = vmatmul.mubr.f32.gmra.mrb[0].mxu0 %v901
    %v969 = vpop.f32.mrb[0].mxu0
    %v970 = vadd.f32 %v807, %v969
    %v971 = vpop.f32.mrb[0].mxu0
    %972 = vdwg.mxu0
    %v973 = vsel %vm337, %v970, 0.0
    %974 = vadd.xlane.f32.xlu0 %v973
    %v975 = vpop.xlane.xlu0 %974
    %v976 = vmul.f32 %v975, %v501
    %v977 = vsub.f32 %v970, %v976
    %v978 = vmul.f32 %v977, %v977
    %v979 = vsel %vm337, %v978, 0.0
    %980 = vadd.xlane.f32.xlu0 %v979
    %v981 = vpop.xlane.xlu0 %980
    %v982 = vmul.f32 %v981, %v501
    %v983 = vadd.f32 %v982, 1e-05
    %v984 = vrsqrt.pop %v983
    %v985 = vmul.f32 %v977, %v984
    %v987 = vlaneseq
    %v988 = vshrl.u32 %v987, 7
    %v989 = vsub.s32 0, %v988
    %v990 = vrot.slane %v708, %v989
    %v993 = vsel %vm337, %v985, 0
    %995 = vmatprep.subr.mxu0 0.0
    %996 = vmatpush1.msra.mxu0 %v700
    %997 = vmatprep.subr.mxu0 0.0
    %998 = vmatpush1.msra.mxu0 %v701
    %999 = vmatprep.subr.mxu0 0.0
    %1000 = vmatpush1.msra.mxu0 %v702
    %1001 = vmatprep.subr.mxu0 0.0
    %1002 = vmatpush1.msra.mxu0 %v703
    %1003 = vmatprep.subr.mxu0 0.0
    %1004 = vmatpush1.msra.mxu0 %v704
    %1005 = vmatprep.subr.mxu0 0.0
    %1006 = vmatpush1.msra.mxu0 %v705
    %1007 = vmatprep.subr.mxu0 0.0
    %1008 = vmatpush1.msra.mxu0 %v706
    %1009 = vmatprep.subr.mxu0 0.0
    %1010 = vmatpush1.msra.mxu0 %v707
    %1011 = vmatprep.subr.mxu0 0.0
    %1012 = vmatpush1.msra.mxu0 0.0
    %1013 = vmatprep.subr.mxu0 0.0
    %1014 = vmatpush1.msra.mxu0 0.0
    %1015 = vmatprep.subr.mxu0 0.0
    %1016 = vmatpush1.msra.mxu0 0.0
    %1017 = vmatprep.subr.mxu0 0.0
    %1018 = vmatpush1.msra.mxu0 0.0
    %1019 = vmatprep.subr.mxu0 0.0
    %1020 = vmatpush1.msra.mxu0 0.0
    %1021 = vmatprep.subr.mxu0 0.0
    %1022 = vmatpush1.msra.mxu0 0.0
    %1023 = vmatprep.subr.mxu0 0.0
    %1024 = vmatpush1.msra.mxu0 0.0
    %1025 = vmatprep.subr.mxu0 0.0
    %1026 = vmatpush1.msra.mxu0 0.0
    %1027 = vmatprep.subr.mxu0 0.0
    %1028 = vmatpush1.msra.mxu0 0.0
    %1029 = vmatprep.subr.mxu0 0.0
    %1030 = vmatpush1.msra.mxu0 0.0
    %1031 = vmatprep.subr.mxu0 0.0
    %1032 = vmatpush1.msra.mxu0 0.0
    %1033 = vmatprep.subr.mxu0 0.0
    %1034 = vmatpush1.msra.mxu0 0.0
    %1035 = vmatprep.subr.mxu0 0.0
    %1036 = vmatpush1.msra.mxu0 0.0
    %1037 = vmatprep.subr.mxu0 0.0
    %1038 = vmatpush1.msra.mxu0 0.0
    %1039 = vmatprep.subr.mxu0 0.0
    %1040 = vmatpush1.msra.mxu0 0.0
    %1041 = vmatprep.subr.mxu0 0.0
    %1042 = vmatpush1.msra.mxu0 0.0
    %1043 = vmatprep.subr.mxu0 0.0
    %1044 = vmatpush1.msra.mxu0 0.0
    %1045 = vmatprep.subr.mxu0 0.0
    %1046 = vmatpush1.msra.mxu0 0.0
    %1047 = vmatprep.subr.mxu0 0.0
    %1048 = vmatpush1.msra.mxu0 0.0
    %1049 = vmatprep.subr.mxu0 0.0
    %1050 = vmatpush1.msra.mxu0 0.0
    %1051 = vmatprep.subr.mxu0 0.0
    %1052 = vmatpush1.msra.mxu0 0.0
    %1053 = vmatprep.subr.mxu0 0.0
    %1054 = vmatpush1.msra.mxu0 0.0
    %1055 = vmatprep.subr.mxu0 0.0
    %1056 = vmatpush1.msra.mxu0 0.0
    %1057 = vmatprep.subr.mxu0 0.0
    %1058 = vmatpush1.msra.mxu0 0.0
    %1059 = vmatprep.mubr.f32.mxu0 0.0
    %1060 = vmatmul.mubr.f32.gmra.mrb[0].mxu0 %v993
    %v1061 = vpop.f32.mrb[0].mxu0
    %v1062 = vadd.f32 %v990, %v1061
    %v1063 = vpop.f32.mrb[0].mxu0
    %1064 = vdwg.mxu0
    %v1065 = vmax.f32 %v1062, 0.0
    %1066 = vmatprep.subr.mxu0 0.0
    %1067 = vmatpush1.msra.mxu0 %v709
    %1068 = vmatprep.subr.mxu0 0.0
    %1069 = vmatpush1.msra.mxu0 %v710
    %1070 = vmatprep.subr.mxu0 0.0
    %1071 = vmatpush1.msra.mxu0 %v711
    %1072 = vmatprep.subr.mxu0 0.0
    %1073 = vmatpush1.msra.mxu0 %v712
    %1074 = vmatprep.subr.mxu0 0.0
    %1075 = vmatpush1.msra.mxu0 %v713
    %1076 = vmatprep.subr.mxu0 0.0
    %1077 = vmatpush1.msra.mxu0 %v714
    %1078 = vmatprep.subr.mxu0 0.0
    %1079 = vmatpush1.msra.mxu0 %v715
    %1080 = vmatprep.subr.mxu0 0.0
    %1081 = vmatpush1.msra.mxu0 %v716
    %1082 = vmatprep.subr.mxu0 0.0
    %1083 = vmatpush1.msra.mxu0 %v717
    %1084 = vmatprep.subr.mxu0 0.0
    %1085 = vmatpush1.msra.mxu0 %v718
    %1086 = vmatprep.subr.mxu0 0.0
    %1087 = vmatpush1.msra.mxu0 %v719
    %1088 = vmatprep.subr.mxu0 0.0
    %1089 = vmatpush1.msra.mxu0 %v720
    %1090 = vmatprep.subr.mxu0 0.0
    %1091 = vmatpush1.msra.mxu0 %v721
    %1092 = vmatprep.subr.mxu0 0.0
    %1093 = vmatpush1.msra.mxu0 %v722
    %1094 = vmatprep.subr.mxu0 0.0
    %1095 = vmatpush1.msra.mxu0 %v723
    %1096 = vmatprep.subr.mxu0 0.0
    %1097 = vmatpush1.msra.mxu0 %v724
    %1098 = vmatprep.subr.mxu0 0.0
    %1099 = vmatpush1.msra.mxu0 0.0
    %1100 = vmatprep.subr.mxu0 0.0
    %1101 = vmatpush1.msra.mxu0 0.0
    %1102 = vmatprep.subr.mxu0 0.0
    %1103 = vmatpush1.msra.mxu0 0.0
    %1104 = vmatprep.subr.mxu0 0.0
    %1105 = vmatpush1.msra.mxu0 0.0
    %1106 = vmatprep.subr.mxu0 0.0
    %1107 = vmatpush1.msra.mxu0 0.0
    %1108 = vmatprep.subr.mxu0 0.0
    %1109 = vmatpush1.msra.mxu0 0.0
    %1110 = vmatprep.subr.mxu0 0.0
    %1111 = vmatpush1.msra.mxu0 0.0
    %1112 = vmatprep.subr.mxu0 0.0
    %1113 = vmatpush1.msra.mxu0 0.0
    %1114 = vmatprep.subr.mxu0 0.0
    %1115 = vmatpush1.msra.mxu0 0.0
    %1116 = vmatprep.subr.mxu0 0.0
    %1117 = vmatpush1.msra.mxu0 0.0
    %1118 = vmatprep.subr.mxu0 0.0
    %1119 = vmatpush1.msra.mxu0 0.0
    %1120 = vmatprep.subr.mxu0 0.0
    %1121 = vmatpush1.msra.mxu0 0.0
    %1122 = vmatprep.subr.mxu0 0.0
    %1123 = vmatpush1.msra.mxu0 0.0
    %1124 = vmatprep.subr.mxu0 0.0
    %1125 = vmatpush1.msra.mxu0 0.0
    %1126 = vmatprep.subr.mxu0 0.0
    %1127 = vmatpush1.msra.mxu0 0.0
    %1128 = vmatprep.subr.mxu0 0.0
    %1129 = vmatpush1.msra.mxu0 0.0
    %1130 = vmatprep.mubr.f32.mxu0 0.0
    %1131 = vmatmul.mubr.f32.gmra.mrb[0].mxu0 %v1065
    %v1132 = vpop.f32.mrb[0].mxu0
    %v1133 = vadd.f32 0.0, %v1132
    %v1134 = vpop.f32.mrb[0].mxu0
    %1135 = vdwg.mxu0
    %v1136 = vadd.f32 %v985, %v1133
    %v1138 = vlaneseq
    %v1139 = vshrl.u32 %v1138, 7
    %v1140 = vsub.s32 0, %v1139
    %v1141 = vrot.slane %v725, %v1140
    %v1143 = vadd.f32 %v1136, %v1141
    %v1144 = vsel %vm337, %v1143, 0.0
    %1145 = vadd.xlane.f32.xlu0 %v1144
    %v1146 = vpop.xlane.xlu0 %1145
    %v1147 = vmul.f32 %v1146, %v501
    %v1148 = vsub.f32 %v1143, %v1147
    %v1149 = vmul.f32 %v1148, %v1148
    %v1150 = vsel %vm337, %v1149, 0.0
    %1151 = vadd.xlane.f32.xlu0 %v1150
    %v1152 = vpop.xlane.xlu0 %1151
    %v1153 = vmul.f32 %v1152, %v501
    %v1154 = vadd.f32 %v1153, 1e-05
    %v1155 = vrsqrt.pop %v1154
    %v1156 = vmul.f32 %v1148, %v1155
    %v1157 = vld [vmem:[%s13] sm:$0xff]
    %v1158 = vld [vmem:[%s13 + $0x8] sm:$0xff]
    %v1159 = vld [vmem:[%s13 + $0x10] sm:$0xff]
    %v1160 = vld [vmem:[%s13 + $0x18] sm:$0xff]
    %v1161 = vld [vmem:[%s13 + $0x20] sm:$0xff]
    %v1162 = vld [vmem:[%s13 + $0x28] sm:$0xff]
    %v1163 = vld [vmem:[%s13 + $0x30] sm:$0xff]
    %v1164 = vld [vmem:[%s13 + $0x38] sm:$0xff]
    %v1165 = vld [vmem:[%s13 + $0x40] sm:$0xff]
    %v1166 = vld [vmem:[%s13 + $0x48] sm:$0xff]
    %v1167 = vld [vmem:[%s13 + $0x50] sm:$0xff]
    %v1168 = vld [vmem:[%s13 + $0x58] sm:$0xff]
    %v1169 = vld [vmem:[%s13 + $0x60] sm:$0xff]
    %v1170 = vld [vmem:[%s13 + $0x68] sm:$0xff]
    %v1171 = vld [vmem:[%s13 + $0x70] sm:$0xff]
    %v1172 = vld [vmem:[%s13 + $0x78] sm:$0xff]
    %v1173 = vld [vmem:[#allocation14] sm:$0x3]
    %v1174 = vld [vmem:[%s15] sm:$0xff]
    %v1175 = vld [vmem:[%s15 + $0x8] sm:$0xff]
    %v1176 = vld [vmem:[%s15 + $0x10] sm:$0xff]
    %v1177 = vld [vmem:[%s15 + $0x18] sm:$0xff]
    %v1178 = vld [vmem:[%s15 + $0x20] sm:$0xff]
    %v1179 = vld [vmem:[%s15 + $0x28] sm:$0xff]
    %v1180 = vld [vmem:[%s15 + $0x30] sm:$0xff]
    %v1181 = vld [vmem:[%s15 + $0x38] sm:$0xff]
    %v1182 = vld [vmem:[#allocation16] sm:$0x1]
    %v1183 = vld [vmem:[%s17] sm:$0xff]
    %v1184 = vld [vmem:[%s17 + $0x8] sm:$0xff]
    %v1185 = vld [vmem:[%s17 + $0x10] sm:$0xff]
    %v1186 = vld [vmem:[%s17 + $0x18] sm:$0xff]
    %v1187 = vld [vmem:[%s17 + $0x20] sm:$0xff]
    %v1188 = vld [vmem:[%s17 + $0x28] sm:$0xff]
    %v1189 = vld [vmem:[%s17 + $0x30] sm:$0xff]
    %v1190 = vld [vmem:[%s17 + $0x38] sm:$0xff]
    %v1191 = vld [vmem:[%s17 + $0x40] sm:$0xff]
    %v1192 = vld [vmem:[%s17 + $0x48] sm:$0xff]
    %v1193 = vld [vmem:[%s17 + $0x50] sm:$0xff]
    %v1194 = vld [vmem:[%s17 + $0x58] sm:$0xff]
    %v1195 = vld [vmem:[%s17 + $0x60] sm:$0xff]
    %v1196 = vld [vmem:[%s17 + $0x68] sm:$0xff]
    %v1197 = vld [vmem:[%s17 + $0x70] sm:$0xff]
    %v1198 = vld [vmem:[%s17 + $0x78] sm:$0xff]
    %v1199 = vld [vmem:[%s18] sm:$0x1]
    %v1201 = vlaneseq
    %v1202 = vshrl.u32 %v1201, 7
    %v1203 = vsub.s32 0, %v1202
    %v1204 = vrot.slane %v1173, %v1203
    %v1205 = vlaneseq
    %v1206 = vshrl.u32 %v1205, 7
    %v1207 = vsub.s32 1, %v1206
    %v1208 = vrot.slane %v1173, %v1207
    %v1212 = vsel %vm337, %v1156, 0
    %1214 = vmatprep.subr.mxu0 %v1158
    %1215 = vmatpush1.msra.mxu0 %v1157
    %1216 = vmatprep.subr.mxu0 %v1160
    %1217 = vmatpush1.msra.mxu0 %v1159
    %1218 = vmatprep.subr.mxu0 %v1162
    %1219 = vmatpush1.msra.mxu0 %v1161
    %1220 = vmatprep.subr.mxu0 %v1164
    %1221 = vmatpush1.msra.mxu0 %v1163
    %1222 = vmatprep.subr.mxu0 %v1166
    %1223 = vmatpush1.msra.mxu0 %v1165
    %1224 = vmatprep.subr.mxu0 %v1168
    %1225 = vmatpush1.msra.mxu0 %v1167
    %1226 = vmatprep.subr.mxu0 %v1170
    %1227 = vmatpush1.msra.mxu0 %v1169
    %1228 = vmatprep.subr.mxu0 %v1172
    %1229 = vmatpush1.msra.mxu0 %v1171
    %1230 = vmatprep.subr.mxu0 0.0
    %1231 = vmatpush1.msra.mxu0 0.0
    %1232 = vmatprep.subr.mxu0 0.0
    %1233 = vmatpush1.msra.mxu0 0.0
    %1234 = vmatprep.subr.mxu0 0.0
    %1235 = vmatpush1.msra.mxu0 0.0
    %1236 = vmatprep.subr.mxu0 0.0
    %1237 = vmatpush1.msra.mxu0 0.0
    %1238 = vmatprep.subr.mxu0 0.0
    %1239 = vmatpush1.msra.mxu0 0.0
    %1240 = vmatprep.subr.mxu0 0.0
    %1241 = vmatpush1.msra.mxu0 0.0
    %1242 = vmatprep.subr.mxu0 0.0
    %1243 = vmatpush1.msra.mxu0 0.0
    %1244 = vmatprep.subr.mxu0 0.0
    %1245 = vmatpush1.msra.mxu0 0.0
    %1246 = vmatprep.subr.mxu0 0.0
    %1247 = vmatpush1.msra.mxu0 0.0
    %1248 = vmatprep.subr.mxu0 0.0
    %1249 = vmatpush1.msra.mxu0 0.0
    %1250 = vmatprep.subr.mxu0 0.0
    %1251 = vmatpush1.msra.mxu0 0.0
    %1252 = vmatprep.subr.mxu0 0.0
    %1253 = vmatpush1.msra.mxu0 0.0
    %1254 = vmatprep.subr.mxu0 0.0
    %1255 = vmatpush1.msra.mxu0 0.0
    %1256 = vmatprep.subr.mxu0 0.0
    %1257 = vmatpush1.msra.mxu0 0.0
    %1258 = vmatprep.subr.mxu0 0.0
    %1259 = vmatpush1.msra.mxu0 0.0
    %1260 = vmatprep.subr.mxu0 0.0
    %1261 = vmatpush1.msra.mxu0 0.0
    %1262 = vmatprep.subr.mxu0 0.0
    %1263 = vmatpush1.msra.mxu0 0.0
    %1264 = vmatprep.subr.mxu0 0.0
    %1265 = vmatpush1.msra.mxu0 0.0
    %1266 = vmatprep.subr.mxu0 0.0
    %1267 = vmatpush1.msra.mxu0 0.0
    %1268 = vmatprep.subr.mxu0 0.0
    %1269 = vmatpush1.msra.mxu0 0.0
    %1270 = vmatprep.subr.mxu0 0.0
    %1271 = vmatpush1.msra.mxu0 0.0
    %1272 = vmatprep.subr.mxu0 0.0
    %1273 = vmatpush1.msra.mxu0 0.0
    %1274 = vmatprep.subr.mxu0 0.0
    %1275 = vmatpush1.msra.mxu0 0.0
    %1276 = vmatprep.subr.mxu0 0.0
    %1277 = vmatpush1.msra.mxu0 0.0
    %1278 = vmatprep.mubr.f32.mxu0 0.0
    %1279 = vmatmul.mubr.f32.gmra.mrb[0].mxu0 %v1212
    %v1280 = vpop.f32.mrb[0].mxu0
    %v1281 = vadd.f32 %v1204, %v1280
    %v1282 = vpop.f32.mrb[0].mxu0
    %v1283 = vadd.f32 %v1208, %v1282
    %1284 = vdwg.mxu0
    %1286 = vrot.lane.b32.xlu0 %v1281, 64
    %v1287 = vpop.permute.xlu0 %1286
    %v1288 = vsel %vm337, %v1281, 0
    %v1290 = vsel %vm337, %v1287, 0
    %1292 = vmatprep.subr.mxu0 0.0
    %1293 = vmatpush1.xpose.msra.mxu0 %v1290
    %1294 = vmatprep.subr.mxu0 0.0
    %1295 = vmatpush1.xpose.msra.mxu0 0.0
    %1296 = vmatprep.subr.mxu0 0.0
    %1297 = vmatpush1.xpose.msra.mxu0 0.0
    %1298 = vmatprep.subr.mxu0 0.0
    %1299 = vmatpush1.xpose.msra.mxu0 0.0
    %1300 = vmatprep.subr.mxu0 0.0
    %1301 = vmatpush1.xpose.msra.mxu0 0.0
    %1302 = vmatprep.subr.mxu0 0.0
    %1303 = vmatpush1.xpose.msra.mxu0 0.0
    %1304 = vmatprep.subr.mxu0 0.0
    %1305 = vmatpush1.xpose.msra.mxu0 0.0
    %1306 = vmatprep.subr.mxu0 0.0
    %1307 = vmatpush1.xpose.msra.mxu0 0.0
    %1308 = vmatprep.subr.mxu0 0.0
    %1309 = vmatpush1.xpose.msra.mxu0 0.0
    %1310 = vmatprep.subr.mxu0 0.0
    %1311 = vmatpush1.xpose.msra.mxu0 0.0
    %1312 = vmatprep.subr.mxu0 0.0
    %1313 = vmatpush1.xpose.msra.mxu0 0.0
    %1314 = vmatprep.subr.mxu0 0.0
    %1315 = vmatpush1.xpose.msra.mxu0 0.0
    %1316 = vmatprep.subr.mxu0 0.0
    %1317 = vmatpush1.xpose.msra.mxu0 0.0
    %1318 = vmatprep.subr.mxu0 0.0
    %1319 = vmatpush1.xpose.msra.mxu0 0.0
    %1320 = vmatprep.subr.mxu0 0.0
    %1321 = vmatpush1.xpose.msra.mxu0 0.0
    %1322 = vmatprep.subr.mxu0 0.0
    %1323 = vmatpush1.xpose.msra.mxu0 0.0
    %1324 = vmatprep.subr.mxu0 0.0
    %1325 = vmatpush1.xpose.msra.mxu0 0.0
    %1326 = vmatprep.subr.mxu0 0.0
    %1327 = vmatpush1.xpose.msra.mxu0 0.0
    %1328 = vmatprep.subr.mxu0 0.0
    %1329 = vmatpush1.xpose.msra.mxu0 0.0
    %1330 = vmatprep.subr.mxu0 0.0
    %1331 = vmatpush1.xpose.msra.mxu0 0.0
    %1332 = vmatprep.subr.mxu0 0.0
    %1333 = vmatpush1.xpose.msra.mxu0 0.0
    %1334 = vmatprep.subr.mxu0 0.0
    %1335 = vmatpush1.xpose.msra.mxu0 0.0
    %1336 = vmatprep.subr.mxu0 0.0
    %1337 = vmatpush1.xpose.msra.mxu0 0.0
    %1338 = vmatprep.subr.mxu0 0.0
    %1339 = vmatpush1.xpose.msra.mxu0 0.0
    %1340 = vmatprep.subr.mxu0 0.0
    %1341 = vmatpush1.xpose.msra.mxu0 0.0
    %1342 = vmatprep.subr.mxu0 0.0
    %1343 = vmatpush1.xpose.msra.mxu0 0.0
    %1344 = vmatprep.subr.mxu0 0.0
    %1345 = vmatpush1.xpose.msra.mxu0 0.0
    %1346 = vmatprep.subr.mxu0 0.0
    %1347 = vmatpush1.xpose.msra.mxu0 0.0
    %1348 = vmatprep.subr.mxu0 0.0
    %1349 = vmatpush1.xpose.msra.mxu0 0.0
    %1350 = vmatprep.subr.mxu0 0.0
    %1351 = vmatpush1.xpose.msra.mxu0 0.0
    %1352 = vmatprep.subr.mxu0 0.0
    %1353 = vmatpush1.xpose.msra.mxu0 0.0
    %1354 = vmatprep.subr.mxu0 0.0
    %1355 = vmatpush1.xpose.msra.mxu0 0.0
    %1356 = vmatprep.mubr.f32.mxu0 0.0
    %1357 = vmatmul.mubr.f32.gmra.mrb[0].mxu0 %v1288
    %v1358 = vpop.f32.mrb[0].mxu0
    %v1359 = vadd.f32 0.0, %v1358
    %v1360 = vpop.f32.mrb[0].mxu0
    %1361 = vdwg.mxu0
    %v1362 = vmul.f32 %v1359, 0.125
    %v1363 = vsel %vm413, %v1362, -inf
    %1364 = vmax.xlane.f32.xlu0 %v1363
    %v1365 = vpop.xlane.xlu0 %1364
    %v1366 = vsub.f32 %v1362, %v1365
    %v1367 = vmul.f32 %v1366, 1.442695
    %v1368 = vpow.pop %v1367
    %v1369 = vsel %vm413, %v1368, 0.0
    %1370 = vadd.xlane.f32.xlu0 %v1369
    %v1371 = vpop.xlane.xlu0 %1370
    %v1372 = vrcp.pop %v1371
    %v1373 = vmul.f32 %v1368, %v1372
    %v1375 = vsel %vm413, %v1373, 0
    %1377 = vmatprep.subr.mxu0 0.0
    %1378 = vmatpush1.msra.mxu0 %v1283
    %1379 = vmatprep.subr.mxu0 0.0
    %1380 = vmatpush1.msra.mxu0 0.0
    %1381 = vmatprep.subr.mxu0 0.0
    %1382 = vmatpush1.msra.mxu0 0.0
    %1383 = vmatprep.subr.mxu0 0.0
    %1384 = vmatpush1.msra.mxu0 0.0
    %1385 = vmatprep.subr.mxu0 0.0
    %1386 = vmatpush1.msra.mxu0 0.0
    %1387 = vmatprep.subr.mxu0 0.0
    %1388 = vmatpush1.msra.mxu0 0.0
    %1389 = vmatprep.subr.mxu0 0.0
    %1390 = vmatpush1.msra.mxu0 0.0
    %1391 = vmatprep.subr.mxu0 0.0
    %1392 = vmatpush1.msra.mxu0 0.0
    %1393 = vmatprep.subr.mxu0 0.0
    %1394 = vmatpush1.msra.mxu0 0.0
    %1395 = vmatprep.subr.mxu0 0.0
    %1396 = vmatpush1.msra.mxu0 0.0
    %1397 = vmatprep.subr.mxu0 0.0
    %1398 = vmatpush1.msra.mxu0 0.0
    %1399 = vmatprep.subr.mxu0 0.0
    %1400 = vmatpush1.msra.mxu0 0.0
    %1401 = vmatprep.subr.mxu0 0.0
    %1402 = vmatpush1.msra.mxu0 0.0
    %1403 = vmatprep.subr.mxu0 0.0
    %1404 = vmatpush1.msra.mxu0 0.0
    %1405 = vmatprep.subr.mxu0 0.0
    %1406 = vmatpush1.msra.mxu0 0.0
    %1407 = vmatprep.subr.mxu0 0.0
    %1408 = vmatpush1.msra.mxu0 0.0
    %1409 = vmatprep.subr.mxu0 0.0
    %1410 = vmatpush1.msra.mxu0 0.0
    %1411 = vmatprep.subr.mxu0 0.0
    %1412 = vmatpush1.msra.mxu0 0.0
    %1413 = vmatprep.subr.mxu0 0.0
    %1414 = vmatpush1.msra.mxu0 0.0
    %1415 = vmatprep.subr.mxu0 0.0
    %1416 = vmatpush1.msra.mxu0 0.0
    %1417 = vmatprep.subr.mxu0 0.0
    %1418 = vmatpush1.msra.mxu0 0.0
    %1419 = vmatprep.subr.mxu0 0.0
    %1420 = vmatpush1.msra.mxu0 0.0
    %1421 = vmatprep.subr.mxu0 0.0
    %1422 = vmatpush1.msra.mxu0 0.0
    %1423 = vmatprep.subr.mxu0 0.0
    %1424 = vmatpush1.msra.mxu0 0.0
    %1425 = vmatprep.subr.mxu0 0.0
    %1426 = vmatpush1.msra.mxu0 0.0
    %1427 = vmatprep.subr.mxu0 0.0
    %1428 = vmatpush1.msra.mxu0 0.0
    %1429 = vmatprep.subr.mxu0 0.0
    %1430 = vmatpush1.msra.mxu0 0.0
    %1431 = vmatprep.subr.mxu0 0.0
    %1432 = vmatpush1.msra.mxu0 0.0
    %1433 = vmatprep.subr.mxu0 0.0
    %1434 = vmatpush1.msra.mxu0 0.0
    %1435 = vmatprep.subr.mxu0 0.0
    %1436 = vmatpush1.msra.mxu0 0.0
    %1437 = vmatprep.subr.mxu0 0.0
    %1438 = vmatpush1.msra.mxu0 0.0
    %1439 = vmatprep.subr.mxu0 0.0
    %1440 = vmatpush1.msra.mxu0 0.0
    %1441 = vmatprep.mubr.f32.mxu0 0.0
    %1442 = vmatmul.mubr.f32.gmra.mrb[0].mxu0 %v1375
    %v1443 = vpop.f32.mrb[0].mxu0
    %v1444 = vadd.f32 %v1281, %v1443
    %v1445 = vpop.f32.mrb[0].mxu0
    %1446 = vdwg.mxu0
    %v1447 = vsel %vm337, %v1444, 0.0
    %1448 = vadd.xlane.f32.xlu0 %v1447
    %v1449 = vpop.xlane.xlu0 %1448
    %v1450 = vmul.f32 %v1449, %v501
    %v1451 = vsub.f32 %v1444, %v1450
    %v1452 = vmul.f32 %v1451, %v1451
    %v1453 = vsel %vm337, %v1452, 0.0
    %1454 = vadd.xlane.f32.xlu0 %v1453
    %v1455 = vpop.xlane.xlu0 %1454
    %v1456 = vmul.f32 %v1455, %v501
    %v1457 = vadd.f32 %v1456, 1e-05
    %v1458 = vrsqrt.pop %v1457
    %v1459 = vmul.f32 %v1451, %v1458
    %v1461 = vlaneseq
    %v1462 = vshrl.u32 %v1461, 7
    %v1463 = vsub.s32 0, %v1462
    %v1464 = vrot.slane %v1182, %v1463
    %v1467 = vsel %vm337, %v1459, 0
    %1469 = vmatprep.subr.mxu0 0.0
    %1470 = vmatpush1.msra.mxu0 %v1174
    %1471 = vmatprep.subr.mxu0 0.0
    %1472 = vmatpush1.msra.mxu0 %v1175
    %1473 = vmatprep.subr.mxu0 0.0
    %1474 = vmatpush1.msra.mxu0 %v1176
    %1475 = vmatprep.subr.mxu0 0.0
    %1476 = vmatpush1.msra.mxu0 %v1177
    %1477 = vmatprep.subr.mxu0 0.0
    %1478 = vmatpush1.msra.mxu0 %v1178
    %1479 = vmatprep.subr.mxu0 0.0
    %1480 = vmatpush1.msra.mxu0 %v1179
    %1481 = vmatprep.subr.mxu0 0.0
    %1482 = vmatpush1.msra.mxu0 %v1180
    %1483 = vmatprep.subr.mxu0 0.0
    %1484 = vmatpush1.msra.mxu0 %v1181
    %1485 = vmatprep.subr.mxu0 0.0
    %1486 = vmatpush1.msra.mxu0 0.0
    %1487 = vmatprep.subr.mxu0 0.0
    %1488 = vmatpush1.msra.mxu0 0.0
    %1489 = vmatprep.subr.mxu0 0.0
    %1490 = vmatpush1.msra.mxu0 0.0
    %1491 = vmatprep.subr.mxu0 0.0
    %1492 = vmatpush1.msra.mxu0 0.0
    %1493 = vmatprep.subr.mxu0 0.0
    %1494 = vmatpush1.msra.mxu0 0.0
    %1495 = vmatprep.subr.mxu0 0.0
    %1496 = vmatpush1.msra.mxu0 0.0
    %1497 = vmatprep.subr.mxu0 0.0
    %1498 = vmatpush1.msra.mxu0 0.0
    %1499 = vmatprep.subr.mxu0 0.0
    %1500 = vmatpush1.msra.mxu0 0.0
    %1501 = vmatprep.subr.mxu0 0.0
    %1502 = vmatpush1.msra.mxu0 0.0
    %1503 = vmatprep.subr.mxu0 0.0
    %1504 = vmatpush1.msra.mxu0 0.0
    %1505 = vmatprep.subr.mxu0 0.0
    %1506 = vmatpush1.msra.mxu0 0.0
    %1507 = vmatprep.subr.mxu0 0.0
    %1508 = vmatpush1.msra.mxu0 0.0
    %1509 = vmatprep.subr.mxu0 0.0
    %1510 = vmatpush1.msra.mxu0 0.0
    %1511 = vmatprep.subr.mxu0 0.0
    %1512 = vmatpush1.msra.mxu0 0.0
    %1513 = vmatprep.subr.mxu0 0.0
    %1514 = vmatpush1.msra.mxu0 0.0
    %1515 = vmatprep.subr.mxu0 0.0
    %1516 = vmatpush1.msra.mxu0 0.0
    %1517 = vmatprep.subr.mxu0 0.0
    %1518 = vmatpush1.msra.mxu0 0.0
    %1519 = vmatprep.subr.mxu0 0.0
    %1520 = vmatpush1.msra.mxu0 0.0
    %1521 = vmatprep.subr.mxu0 0.0
    %1522 = vmatpush1.msra.mxu0 0.0
    %1523 = vmatprep.subr.mxu0 0.0
    %1524 = vmatpush1.msra.mxu0 0.0
    %1525 = vmatprep.subr.mxu0 0.0
    %1526 = vmatpush1.msra.mxu0 0.0
    %1527 = vmatprep.subr.mxu0 0.0
    %1528 = vmatpush1.msra.mxu0 0.0
    %1529 = vmatprep.subr.mxu0 0.0
    %1530 = vmatpush1.msra.mxu0 0.0
    %1531 = vmatprep.subr.mxu0 0.0
    %1532 = vmatpush1.msra.mxu0 0.0
    %1533 = vmatprep.mubr.f32.mxu0 0.0
    %1534 = vmatmul.mubr.f32.gmra.mrb[0].mxu0 %v1467
    %v1535 = vpop.f32.mrb[0].mxu0
    %v1536 = vadd.f32 %v1464, %v1535
    %v1537 = vpop.f32.mrb[0].mxu0
    %1538 = vdwg.mxu0
    %v1539 = vmax.f32 %v1536, 0.0
    %1540 = vmatprep.subr.mxu0 0.0
    %1541 = vmatpush1.msra.mxu0 %v1183
    %1542 = vmatprep.subr.mxu0 0.0
    %1543 = vmatpush1.msra.mxu0 %v1184
    %1544 = vmatprep.subr.mxu0 0.0
    %1545 = vmatpush1.msra.mxu0 %v1185
    %1546 = vmatprep.subr.mxu0 0.0
    %1547 = vmatpush1.msra.mxu0 %v1186
    %1548 = vmatprep.subr.mxu0 0.0
    %1549 = vmatpush1.msra.mxu0 %v1187
    %1550 = vmatprep.subr.mxu0 0.0
    %1551 = vmatpush1.msra.mxu0 %v1188
    %1552 = vmatprep.subr.mxu0 0.0
    %1553 = vmatpush1.msra.mxu0 %v1189
    %1554 = vmatprep.subr.mxu0 0.0
    %1555 = vmatpush1.msra.mxu0 %v1190
    %1556 = vmatprep.subr.mxu0 0.0
    %1557 = vmatpush1.msra.mxu0 %v1191
    %1558 = vmatprep.subr.mxu0 0.0
    %1559 = vmatpush1.msra.mxu0 %v1192
    %1560 = vmatprep.subr.mxu0 0.0
    %1561 = vmatpush1.msra.mxu0 %v1193
    %1562 = vmatprep.subr.mxu0 0.0
    %1563 = vmatpush1.msra.mxu0 %v1194
    %1564 = vmatprep.subr.mxu0 0.0
    %1565 = vmatpush1.msra.mxu0 %v1195
    %1566 = vmatprep.subr.mxu0 0.0
    %1567 = vmatpush1.msra.mxu0 %v1196
    %1568 = vmatprep.subr.mxu0 0.0
    %1569 = vmatpush1.msra.mxu0 %v1197
    %1570 = vmatprep.subr.mxu0 0.0
    %1571 = vmatpush1.msra.mxu0 %v1198
    %1572 = vmatprep.subr.mxu0 0.0
    %1573 = vmatpush1.msra.mxu0 0.0
    %1574 = vmatprep.subr.mxu0 0.0
    %1575 = vmatpush1.msra.mxu0 0.0
    %1576 = vmatprep.subr.mxu0 0.0
    %1577 = vmatpush1.msra.mxu0 0.0
    %1578 = vmatprep.subr.mxu0 0.0
    %1579 = vmatpush1.msra.mxu0 0.0
    %1580 = vmatprep.subr.mxu0 0.0
    %1581 = vmatpush1.msra.mxu0 0.0
    %1582 = vmatprep.subr.mxu0 0.0
    %1583 = vmatpush1.msra.mxu0 0.0
    %1584 = vmatprep.subr.mxu0 0.0
    %1585 = vmatpush1.msra.mxu0 0.0
    %1586 = vmatprep.subr.mxu0 0.0
    %1587 = vmatpush1.msra.mxu0 0.0
    %1588 = vmatprep.subr.mxu0 0.0
    %1589 = vmatpush1.msra.mxu0 0.0
    %1590 = vmatprep.subr.mxu0 0.0
    %1591 = vmatpush1.msra.mxu0 0.0
    %1592 = vmatprep.subr.mxu0 0.0
    %1593 = vmatpush1.msra.mxu0 0.0
    %1594 = vmatprep.subr.mxu0 0.0
    %1595 = vmatpush1.msra.mxu0 0.0
    %1596 = vmatprep.subr.mxu0 0.0
    %1597 = vmatpush1.msra.mxu0 0.0
    %1598 = vmatprep.subr.mxu0 0.0
    %1599 = vmatpush1.msra.mxu0 0.0
    %1600 = vmatprep.subr.mxu0 0.0
    %1601 = vmatpush1.msra.mxu0 0.0
    %1602 = vmatprep.subr.mxu0 0.0
    %1603 = vmatpush1.msra.mxu0 0.0
    %1604 = vmatprep.mubr.f32.mxu0 0.0
    %1605 = vmatmul.mubr.f32.gmra.mrb[0].mxu0 %v1539
    %v1606 = vpop.f32.mrb[0].mxu0
    %v1607 = vadd.f32 0.0, %v1606
    %v1608 = vpop.f32.mrb[0].mxu0
    %1609 = vdwg.mxu0
    %v1610 = vadd.f32 %v1459, %v1607
    %v1612 = vlaneseq
    %v1613 = vshrl.u32 %v1612, 7
    %v1614 = vsub.s32 0, %v1613
    %v1615 = vrot.slane %v1199, %v1614
    %v1617 = vadd.f32 %v1610, %v1615
    %v1618 = vsel %vm337, %v1617, 0.0
    %1619 = vadd.xlane.f32.xlu0 %v1618
    %v1620 = vpop.xlane.xlu0 %1619
    %v1621 = vmul.f32 %v1620, %v501
    %v1622 = vsub.f32 %v1617, %v1621
    %v1623 = vmul.f32 %v1622, %v1622
    %v1624 = vsel %vm337, %v1623, 0.0
    %1625 = vadd.xlane.f32.xlu0 %v1624
    %v1626 = vpop.xlane.xlu0 %1625
    %v1627 = vmul.f32 %v1626, %v501
    %v1628 = vadd.f32 %v1627, 1e-05
    %v1629 = vrsqrt.pop %v1628
    %v1630 = vmul.f32 %v1622, %v1629
    %v1631 = vld [vmem:[#allocation17] sm:$0xff]
    %v1632 = vld [vmem:[#allocation17 + $0x8] sm:$0xff]
    %v1633 = vld [vmem:[#allocation17 + $0x10] sm:$0xff]
    %v1634 = vld [vmem:[#allocation17 + $0x18] sm:$0xff]
    %v1635 = vld [vmem:[#allocation17 + $0x20] sm:$0xff]
    %v1636 = vld [vmem:[#allocation17 + $0x28] sm:$0xff]
    %v1637 = vld [vmem:[#allocation17 + $0x30] sm:$0xff]
    %v1638 = vld [vmem:[#allocation17 + $0x38] sm:$0xff]
    %v1639 = vld [vmem:[%s20] sm:$0x1]
    %v1640 = vld [vmem:[#allocation19] sm:$0xff]
    %v1641 = vld [vmem:[#allocation19 + $0x8] sm:$0xff]
    %v1642 = vld [vmem:[#allocation19 + $0x10] sm:$0xff]
    %v1643 = vld [vmem:[#allocation19 + $0x18] sm:$0xff]
    %v1644 = vld [vmem:[#allocation19 + $0x20] sm:$0xff]
    %v1645 = vld [vmem:[#allocation19 + $0x28] sm:$0xff]
    %v1646 = vld [vmem:[#allocation19 + $0x30] sm:$0xff]
    %v1647 = vld [vmem:[#allocation19 + $0x38] sm:$0xff]
    %v1648 = vld [vmem:[%s22] sm:$0x1]
    %v1649 = vld [vmem:[%s23] sm:$0xff]
    %v1650 = vld [vmem:[%s23 + $0x8] sm:$0xff]
    %v1651 = vld [vmem:[%s23 + $0x10] sm:$0xff]
    %v1652 = vld [vmem:[%s23 + $0x18] sm:$0xff]
    %v1653 = vld [vmem:[%s23 + $0x20] sm:$0xff]
    %v1654 = vld [vmem:[%s23 + $0x28] sm:$0xff]
    %v1655 = vld [vmem:[%s23 + $0x30] sm:$0xff]
    %v1656 = vld [vmem:[%s23 + $0x38] sm:$0xff]
    %v1657 = vld [vmem:[%s24] sm:$0x1]
    %v1659 = vlaneseq
    %v1660 = vshrl.u32 %v1659, 7
    %v1661 = vsub.s32 0, %v1660
    %v1662 = vrot.slane %v1639, %v1661
    %v1665 = vsel %vm337, %v1630, 0
    %1667 = vmatprep.subr.mxu0 0.0
    %1668 = vmatpush1.msra.mxu0 %v1631
    %1669 = vmatprep.subr.mxu0 0.0
    %1670 = vmatpush1.msra.mxu0 %v1632
    %1671 = vmatprep.subr.mxu0 0.0
    %1672 = vmatpush1.msra.mxu0 %v1633
    %1673 = vmatprep.subr.mxu0 0.0
    %1674 = vmatpush1.msra.mxu0 %v1634
    %1675 = vmatprep.subr.mxu0 0.0
    %1676 = vmatpush1.msra.mxu0 %v1635
    %1677 = vmatprep.subr.mxu0 0.0
    %1678 = vmatpush1.msra.mxu0 %v1636
    %1679 = vmatprep.subr.mxu0 0.0
    %1680 = vmatpush1.msra.mxu0 %v1637
    %1681 = vmatprep.subr.mxu0 0.0
    %1682 = vmatpush1.msra.mxu0 %v1638
    %1683 = vmatprep.subr.mxu0 0.0
    %1684 = vmatpush1.msra.mxu0 0.0
    %1685 = vmatprep.subr.mxu0 0.0
    %1686 = vmatpush1.msra.mxu0 0.0
    %1687 = vmatprep.subr.mxu0 0.0
    %1688 = vmatpush1.msra.mxu0 0.0
    %1689 = vmatprep.subr.mxu0 0.0
    %1690 = vmatpush1.msra.mxu0 0.0
    %1691 = vmatprep.subr.mxu0 0.0
    %1692 = vmatpush1.msra.mxu0 0.0
    %1693 = vmatprep.subr.mxu0 0.0
    %1694 = vmatpush1.msra.mxu0 0.0
    %1695 = vmatprep.subr.mxu0 0.0
    %1696 = vmatpush1.msra.mxu0 0.0
    %1697 = vmatprep.subr.mxu0 0.0
    %1698 = vmatpush1.msra.mxu0 0.0
    %1699 = vmatprep.subr.mxu0 0.0
    %1700 = vmatpush1.msra.mxu0 0.0
    %1701 = vmatprep.subr.mxu0 0.0
    %1702 = vmatpush1.msra.mxu0 0.0
    %1703 = vmatprep.subr.mxu0 0.0
    %1704 = vmatpush1.msra.mxu0 0.0
    %1705 = vmatprep.subr.mxu0 0.0
    %1706 = vmatpush1.msra.mxu0 0.0
    %1707 = vmatprep.subr.mxu0 0.0
    %1708 = vmatpush1.msra.mxu0 0.0
    %1709 = vmatprep.subr.mxu0 0.0
    %1710 = vmatpush1.msra.mxu0 0.0
    %1711 = vmatprep.subr.mxu0 0.0
    %1712 = vmatpush1.msra.mxu0 0.0
    %1713 = vmatprep.subr.mxu0 0.0
    %1714 = vmatpush1.msra.mxu0 0.0
    %1715 = vmatprep.subr.mxu0 0.0
    %1716 = vmatpush1.msra.mxu0 0.0
    %1717 = vmatprep.subr.mxu0 0.0
    %1718 = vmatpush1.msra.mxu0 0.0
    %1719 = vmatprep.subr.mxu0 0.0
    %1720 = vmatpush1.msra.mxu0 0.0
    %1721 = vmatprep.subr.mxu0 0.0
    %1722 = vmatpush1.msra.mxu0 0.0
    %1723 = vmatprep.subr.mxu0 0.0
    %1724 = vmatpush1.msra.mxu0 0.0
    %1725 = vmatprep.subr.mxu0 0.0
    %1726 = vmatpush1.msra.mxu0 0.0
    %1727 = vmatprep.subr.mxu0 0.0
    %1728 = vmatpush1.msra.mxu0 0.0
    %1729 = vmatprep.subr.mxu0 0.0
    %1730 = vmatpush1.msra.mxu0 0.0
    %1731 = vmatprep.mubr.f32.mxu0 0.0
    %1732 = vmatmul.mubr.f32.gmra.mrb[0].mxu0 %v1665
    %v1733 = vpop.f32.mrb[0].mxu0
    %v1734 = vadd.f32 %v1662, %v1733
    %v1735 = vpop.f32.mrb[0].mxu0
    %1736 = vdwg.mxu0
    %v1737 = vmax.f32 %v1734, 0.0
    %v1739 = vlaneseq
    %v1740 = vshrl.u32 %v1739, 7
    %v1741 = vsub.s32 0, %v1740
    %v1742 = vrot.slane %v1648, %v1741
    %v1745 = vsel %vm337, %v1737, 0
    %1747 = vmatprep.subr.mxu0 0.0
    %1748 = vmatpush1.msra.mxu0 %v1640
    %1749 = vmatprep.subr.mxu0 0.0
    %1750 = vmatpush1.msra.mxu0 %v1641
    %1751 = vmatprep.subr.mxu0 0.0
    %1752 = vmatpush1.msra.mxu0 %v1642
    %1753 = vmatprep.subr.mxu0 0.0
    %1754 = vmatpush1.msra.mxu0 %v1643
    %1755 = vmatprep.subr.mxu0 0.0
    %1756 = vmatpush1.msra.mxu0 %v1644
    %1757 = vmatprep.subr.mxu0 0.0
    %1758 = vmatpush1.msra.mxu0 %v1645
    %1759 = vmatprep.subr.mxu0 0.0
    %1760 = vmatpush1.msra.mxu0 %v1646
    %1761 = vmatprep.subr.mxu0 0.0
    %1762 = vmatpush1.msra.mxu0 %v1647
    %1763 = vmatprep.subr.mxu0 0.0
    %1764 = vmatpush1.msra.mxu0 0.0
    %1765 = vmatprep.subr.mxu0 0.0
    %1766 = vmatpush1.msra.mxu0 0.0
    %1767 = vmatprep.subr.mxu0 0.0
    %1768 = vmatpush1.msra.mxu0 0.0
    %1769 = vmatprep.subr.mxu0 0.0
    %1770 = vmatpush1.msra.mxu0 0.0
    %1771 = vmatprep.subr.mxu0 0.0
    %1772 = vmatpush1.msra.mxu0 0.0
    %1773 = vmatprep.subr.mxu0 0.0
    %1774 = vmatpush1.msra.mxu0 0.0
    %1775 = vmatprep.subr.mxu0 0.0
    %1776 = vmatpush1.msra.mxu0 0.0
    %1777 = vmatprep.subr.mxu0 0.0
    %1778 = vmatpush1.msra.mxu0 0.0
    %1779 = vmatprep.subr.mxu0 0.0
    %1780 = vmatpush1.msra.mxu0 0.0
    %1781 = vmatprep.subr.mxu0 0.0
    %1782 = vmatpush1.msra.mxu0 0.0
    %1783 = vmatprep.subr.mxu0 0.0
    %1784 = vmatpush1.msra.mxu0 0.0
    %1785 = vmatprep.subr.mxu0 0.0
    %1786 = vmatpush1.msra.mxu0 0.0
    %1787 = vmatprep.subr.mxu0 0.0
    %1788 = vmatpush1.msra.mxu0 0.0
    %1789 = vmatprep.subr.mxu0 0.0
    %1790 = vmatpush1.msra.mxu0 0.0
    %1791 = vmatprep.subr.mxu0 0.0
    %1792 = vmatpush1.msra.mxu0 0.0
    %1793 = vmatprep.subr.mxu0 0.0
    %1794 = vmatpush1.msra.mxu0 0.0
    %1795 = vmatprep.subr.mxu0 0.0
    %1796 = vmatpush1.msra.mxu0 0.0
    %1797 = vmatprep.subr.mxu0 0.0
    %1798 = vmatpush1.msra.mxu0 0.0
    %1799 = vmatprep.subr.mxu0 0.0
    %1800 = vmatpush1.msra.mxu0 0.0
    %1801 = vmatprep.subr.mxu0 0.0
    %1802 = vmatpush1.msra.mxu0 0.0
    %1803 = vmatprep.subr.mxu0 0.0
    %1804 = vmatpush1.msra.mxu0 0.0
    %1805 = vmatprep.subr.mxu0 0.0
    %1806 = vmatpush1.msra.mxu0 0.0
    %1807 = vmatprep.subr.mxu0 0.0
    %1808 = vmatpush1.msra.mxu0 0.0
    %1809 = vmatprep.subr.mxu0 0.0
    %1810 = vmatpush1.msra.mxu0 0.0
    %1811 = vmatprep.mubr.f32.mxu0 0.0
    %1812 = vmatmul.mubr.f32.gmra.mrb[0].mxu0 %v1745
    %v1813 = vpop.f32.mrb[0].mxu0
    %v1814 = vadd.f32 %v1742, %v1813
    %v1815 = vpop.f32.mrb[0].mxu0
    %1816 = vdwg.mxu0
    %v1817 = vmax.f32 %v1814, 0.0
    %v1819 = vlaneseq
    %v1820 = vshrl.u32 %v1819, 7
    %v1821 = vsub.s32 0, %v1820
    %v1822 = vrot.slane %v1657, %v1821
    %v1825 = vsel %vm337, %v1817, 0
    %1827 = vmatprep.subr.mxu0 0.0
    %1828 = vmatpush1.msra.mxu0 %v1649
    %1829 = vmatprep.subr.mxu0 0.0
    %1830 = vmatpush1.msra.mxu0 %v1650
    %1831 = vmatprep.subr.mxu0 0.0
    %1832 = vmatpush1.msra.mxu0 %v1651
    %1833 = vmatprep.subr.mxu0 0.0
    %1834 = vmatpush1.msra.mxu0 %v1652
    %1835 = vmatprep.subr.mxu0 0.0
    %1836 = vmatpush1.msra.mxu0 %v1653
    %1837 = vmatprep.subr.mxu0 0.0
    %1838 = vmatpush1.msra.mxu0 %v1654
    %1839 = vmatprep.subr.mxu0 0.0
    %1840 = vmatpush1.msra.mxu0 %v1655
    %1841 = vmatprep.subr.mxu0 0.0
    %1842 = vmatpush1.msra.mxu0 %v1656
    %1843 = vmatprep.subr.mxu0 0.0
    %1844 = vmatpush1.msra.mxu0 0.0
    %1845 = vmatprep.subr.mxu0 0.0
    %1846 = vmatpush1.msra.mxu0 0.0
    %1847 = vmatprep.subr.mxu0 0.0
    %1848 = vmatpush1.msra.mxu0 0.0
    %1849 = vmatprep.subr.mxu0 0.0
    %1850 = vmatpush1.msra.mxu0 0.0
    %1851 = vmatprep.subr.mxu0 0.0
    %1852 = vmatpush1.msra.mxu0 0.0
    %1853 = vmatprep.subr.mxu0 0.0
    %1854 = vmatpush1.msra.mxu0 0.0
    %1855 = vmatprep.subr.mxu0 0.0
    %1856 = vmatpush1.msra.mxu0 0.0
    %1857 = vmatprep.subr.mxu0 0.0
    %1858 = vmatpush1.msra.mxu0 0.0
    %1859 = vmatprep.subr.mxu0 0.0
    %1860 = vmatpush1.msra.mxu0 0.0
    %1861 = vmatprep.subr.mxu0 0.0
    %1862 = vmatpush1.msra.mxu0 0.0
    %1863 = vmatprep.subr.mxu0 0.0
    %1864 = vmatpush1.msra.mxu0 0.0
    %1865 = vmatprep.subr.mxu0 0.0
    %1866 = vmatpush1.msra.mxu0 0.0
    %1867 = vmatprep.subr.mxu0 0.0
    %1868 = vmatpush1.msra.mxu0 0.0
    %1869 = vmatprep.subr.mxu0 0.0
    %1870 = vmatpush1.msra.mxu0 0.0
    %1871 = vmatprep.subr.mxu0 0.0
    %1872 = vmatpush1.msra.mxu0 0.0
    %1873 = vmatprep.subr.mxu0 0.0
    %1874 = vmatpush1.msra.mxu0 0.0
    %1875 = vmatprep.subr.mxu0 0.0
    %1876 = vmatpush1.msra.mxu0 0.0
    %1877 = vmatprep.subr.mxu0 0.0
    %1878 = vmatpush1.msra.mxu0 0.0
    %1879 = vmatprep.subr.mxu0 0.0
    %1880 = vmatpush1.msra.mxu0 0.0
    %1881 = vmatprep.subr.mxu0 0.0
    %1882 = vmatpush1.msra.mxu0 0.0
    %1883 = vmatprep.subr.mxu0 0.0
    %1884 = vmatpush1.msra.mxu0 0.0
    %1885 = vmatprep.subr.mxu0 0.0
    %1886 = vmatpush1.msra.mxu0 0.0
    %1887 = vmatprep.subr.mxu0 0.0
    %1888 = vmatpush1.msra.mxu0 0.0
    %1889 = vmatprep.subr.mxu0 0.0
    %1890 = vmatpush1.msra.mxu0 0.0
    %1891 = vmatprep.mubr.f32.mxu0 0.0
    %1892 = vmatmul.mubr.f32.gmra.mrb[0].mxu0 %v1825
    %v1893 = vpop.f32.mrb[0].mxu0
    %v1894 = vadd.f32 %v1822, %v1893
    %v1895 = vpop.f32.mrb[0].mxu0
    %1896 = vdwg.mxu0
    %1897 = vst.msk [vmem:[#allocation20] sm:$0xff] %vm259, %v1894
    // Predicated region
    $region146: #{tpu_custom_call.1} parent=1 // pred_check
      _
    $region147: #{tpu_custom_call.1} parent=1 // pred_check_branch
      %1899 = sbr.rel (0) target = $region149
    $region148: #{tpu_custom_call.1} parent=1 // pred_region
      %s1901 = ssub.s32 128, 128
      %1902 = vsyncadd [#allocation4], %s1901
      %s1904 = sshll.u32 [#allocation20], 4
      %s1905 = int_to_ptr.vmem [resolvable:$true] %s1904
      %1907 = dma.vmem_to_hbm [thread:$0]  %s1905, 128, %s25, [#allocation4]
    $region149: #{tpu_custom_call.1} parent=1 // pred_fallthru
      _
    // Predicated region
    $region150: #{tpu_custom_call.1} parent=1 // pred_check
      _
    $region151: #{tpu_custom_call.1} parent=1 // pred_check_branch
      %1909 = sbr.rel (0) target = $region153
    $region152: #{tpu_custom_call.1} parent=1 // pred_region
      %1910 = dma.done [#allocation4], 128
    $region153: #{tpu_custom_call.1} parent=1 // pred_fallthru
      _
    %1911 = vsyncpa [#allocation3], 1
    %1912 = vsyncpa [#allocation6], 1
    %1913 = vsyncpa [#allocation9], 1
    %1914 = vsyncpa [#allocation12], 1
    %1915 = vsyncpa [#allocation15], 1
    %1916 = vsyncpa [#allocation18], 1
    %1917 = vsyncpa [#allocation4], 1

</llo_original>
